<compile_context>
chip_gen: v6e
topology: v6e:2x2x1
jax: 0.10.0
libtpu: 0.0.40
codegen_flags: <defaults>
</compile_context>

<pallas_src>
import functools
import math

import jax
import jax.numpy as jnp
from jax import lax
from jax.experimental import pallas as pl
from jax.experimental.pallas import tpu as pltpu

ENC_DIM = 32
NUM_HEADS = 4
HEAD_DIM = ENC_DIM // NUM_HEADS
SEQ = 8
BATCH = 2
HIDDEN = 4 * ENC_DIM
LN_EPS = 1e-5


def _gelu_exact(x):
    # Exact (erf-based) GELU, matching PyTorch nn.GELU(approximate='none').
    # erf via Abramowitz & Stegun 7.1.26 (|err| < 1.5e-7); exp rides the EUP.
    # jax.lax.erf is avoided because its Mosaic lowering is not guaranteed.
    a1, a2, a3, a4, a5 = (0.254829592, -0.284496736, 1.421413741,
                          -1.453152027, 1.061405429)
    p = 0.3275911
    z = x * (1.0 / math.sqrt(2.0))
    az = jnp.abs(z)
    t = 1.0 / (1.0 + p * az)
    poly = t * (a1 + t * (a2 + t * (a3 + t * (a4 + t * a5))))
    half_tail = 0.5 * poly * jnp.exp(-z * z)          # = 0.5*(1 - erf(|z|))
    phi = jnp.where(z >= 0.0, 1.0 - half_tail, half_tail)
    return x * phi


def _layernorm(x, g, b):
    mean = jnp.mean(x, axis=-1, keepdims=True)
    var = jnp.mean((x - mean) ** 2, axis=-1, keepdims=True)
    return (x - mean) * lax.rsqrt(var + LN_EPS) * g + b


def _encoder_kernel(x_ref, vec_ref, wrow_ref, w2_ref, o_ref, *,
                    batch, seq, num_heads):
    n, d = x_ref.shape                       # n = batch*seq, d = enc_dim
    hd = d // num_heads
    hidden = w2_ref.shape[0]

    # ---- carve packed parameters (static slices of resident VMEM slabs) ----
    ln1_g = vec_ref[0:1, 0:d]
    ln1_b = vec_ref[1:2, 0:d]
    ln2_g = vec_ref[2:3, 0:d]
    ln2_b = vec_ref[3:4, 0:d]
    bqkv = vec_ref[4:5, 0:3 * d]             # head-major, Q-scale pre-folded
    bo = vec_ref[5:6, 0:d]
    b1 = vec_ref[6:7, 0:hidden]
    b2 = vec_ref[7:8, 0:d]
    wqkv = wrow_ref[0:d, 0:3 * d]            # (d, 3d), head-major columns
    wo = wrow_ref[d:2 * d, 0:d]              # (d, d)
    w1 = wrow_ref[2 * d:3 * d, 0:hidden]     # (d, hidden)
    w2 = w2_ref[...]                         # (hidden, d)

    x = x_ref[...]                           # (n, d) f32
    x_res = x

    # ---- norm1 + fused QKV projection (one 96-wide matmul) ----
    h1 = _layernorm(x, ln1_g, ln1_b)
    qkv = jnp.dot(h1, wqkv, preferred_element_type=jnp.float32) + bqkv  # (n, 3d)

    # ---- head split: 4 head-block lane slices + one concat ----
    # wqkv columns are packed per head as [q_h | k_h | v_h] (3*hd wide).
    blocks = [qkv[:, i * 3 * hd:(i + 1) * 3 * hd] for i in range(num_heads)]
    qkv_h = jnp.concatenate(blocks, axis=0)                # (H*n, 3hd)
    qkv_h = qkv_h.reshape(num_heads * batch, seq, 3 * hd)  # sublane split @8: no-op
    q = qkv_h[:, :, 0:hd]
    k = qkv_h[:, :, hd:2 * hd]
    v = qkv_h[:, :, 2 * hd:3 * hd]

    # ---- batched attention over (heads*batch, seq, hd) ----
    scores = jnp.einsum("bqd,bkd->bqk", q, k, preferred_element_type=jnp.float32)
    scores = scores - jnp.max(scores, axis=-1, keepdims=True)
    e = jnp.exp(scores)
    denom = jnp.sum(e, axis=-1, keepdims=True)
    r = pl.reciprocal(denom, approx=True)
    r = r * (2.0 - denom * r)                # one Newton step -> ~f32 accuracy
    probs = e * r
    ctx = jnp.einsum("bqk,bkd->bqd", probs, v,
                     preferred_element_type=jnp.float32)   # (H*B, S, hd)

    # ---- head merge (one lane concat) + single 32-deep output projection ----
    parts = [ctx[i * batch:(i + 1) * batch].reshape(n, hd)
             for i in range(num_heads)]
    ctx2d = jnp.concatenate(parts, axis=-1)                # (n, d), cols (head, hd)
    attn = jnp.dot(ctx2d, wo, preferred_element_type=jnp.float32) + bo

    x = attn + x_res
    x_res2 = x

    # ---- norm2 + MLP ----
    h2 = _layernorm(x, ln2_g, ln2_b)
    m = jnp.dot(h2, w1, preferred_element_type=jnp.float32) + b1
    m = _gelu_exact(m)
    m = jnp.dot(m, w2, preferred_element_type=jnp.float32) + b2
    # 2 KiB masked store kept as-is (lane-dense repack not worth it here).
    o_ref[...] = (m + x_res2).astype(o_ref.dtype)


def _pack_params(p, enc_dim, num_heads):
    """Pack all parameters into 3 slabs; fold the attention scale into Q."""
    d = enc_dim
    hd = d // num_heads
    hidden = 4 * d
    assert 3 * d <= hidden, "packing assumes 3*enc_dim <= hidden width"
    scale = 1.0 / math.sqrt(hd)

    wq, wk, wv = p["wq"] * scale, p["wk"], p["wv"]
    bq, bk, bv = p["bq"] * scale, p["bk"], p["bv"]
    wqkv_cols, bqkv_cols = [], []
    for h in range(num_heads):                 # head-major column order
        sl = slice(h * hd, (h + 1) * hd)
        wqkv_cols += [wq[:, sl], wk[:, sl], wv[:, sl]]
        bqkv_cols += [bq[:, sl], bk[:, sl], bv[:, sl]]
    wqkv = jnp.concatenate(wqkv_cols, axis=1)   # (d, 3d)
    bqkv = jnp.concatenate(bqkv_cols, axis=1)   # (1, 3d)

    def pad_cols(a, width):
        return jnp.pad(a, ((0, 0), (0, width - a.shape[1])))

    wrow = jnp.concatenate([pad_cols(wqkv, hidden),
                            pad_cols(p["wo"], hidden),
                            p["w1"]], axis=0)   # (3d, hidden) = (96, 128)

    def vec_row(v):
        return pad_cols(jnp.asarray(v, jnp.float32).reshape(1, -1), hidden)

    vec = jnp.concatenate([vec_row(p["ln1_g"]), vec_row(p["ln1_b"]),
                           vec_row(p["ln2_g"]), vec_row(p["ln2_b"]),
                           vec_row(bqkv), vec_row(p["bo"]),
                           vec_row(p["b1"]), vec_row(p["b2"])], axis=0)  # (8, 128)
    return vec.astype(jnp.float32), wrow.astype(jnp.float32), p["w2"]


def encoder_forward(x, params, *, num_heads=NUM_HEADS):
    B, S, D = x.shape
    n, hidden, hd = B * S, 4 * D, D // num_heads
    vec, wrow, w2 = _pack_params(params, D, num_heads)
    x2d = x.reshape(n, D)

    flops = (2 * n * D * 3 * D                          # fused QKV
             + 2 * 2 * B * num_heads * S * S * hd       # scores + probs@v
             + 2 * n * D * D                            # output projection
             + 2 * 2 * n * D * hidden)                  # MLP
    transcendentals = B * num_heads * S * S + n * hidden + B * num_heads * S
    bytes_accessed = 4 * (2 * n * D + vec.size + wrow.size + w2.size)
    cost = pl.CostEstimate(flops=int(flops),
                           transcendentals=int(transcendentals),
                           bytes_accessed=int(bytes_accessed))

    vmem = pltpu.MemorySpace.VMEM
    out2d = pl.pallas_call(
        functools.partial(_encoder_kernel, batch=B, seq=S, num_heads=num_heads),
        out_shape=jax.ShapeDtypeStruct((n, D), x.dtype),
        in_specs=[pl.BlockSpec(memory_space=vmem)] * 4,
        out_specs=pl.BlockSpec(memory_space=vmem),
        cost_estimate=cost,
    )(x2d, vec, wrow, w2)
    return out2d.reshape(B, S, D)


def init_params(key, enc_dim):
    hidden = 4 * enc_dim
    keys = jax.random.split(key, 6)

    def lin(k, fan_in, fan_out):
        bound = 1.0 / math.sqrt(fan_in)
        kw, kb = jax.random.split(k)
        w = jax.random.uniform(kw, (fan_in, fan_out), jnp.float32, -bound, bound)
        b = jax.random.uniform(kb, (1, fan_out), jnp.float32, -bound, bound)
        return w, b

    wq, bq = lin(keys[0], enc_dim, enc_dim)
    wk, bk = lin(keys[1], enc_dim, enc_dim)
    wv, bv = lin(keys[2], enc_dim, enc_dim)
    wo, bo = lin(keys[3], enc_dim, enc_dim)
    w1, b1 = lin(keys[4], enc_dim, hidden)
    w2, b2 = lin(keys[5], hidden, enc_dim)
    return dict(
        ln1_g=jnp.ones((1, enc_dim), jnp.float32),
        ln1_b=jnp.zeros((1, enc_dim), jnp.float32),
        wq=wq, bq=bq, wk=wk, bk=bk, wv=wv, bv=bv, wo=wo, bo=bo,
        ln2_g=jnp.ones((1, enc_dim), jnp.float32),
        ln2_b=jnp.zeros((1, enc_dim), jnp.float32),
        w1=w1, b1=b1, w2=w2, b2=b2,
    )


def encoder_ref(x, p):
    """Pure-JAX reference mirroring the PyTorch forward (unfused params)."""
    def ln(t, g, b):
        mean = t.mean(-1, keepdims=True)
        var = ((t - mean) ** 2).mean(-1, keepdims=True)
        return (t - mean) / jnp.sqrt(var + LN_EPS) * g[0] + b[0]

    B, S, D = x.shape
    with jax.default_matmul_precision("highest"):
        h = ln(x, p["ln1_g"], p["ln1_b"])
        q = h @ p["wq"] + p["bq"][0]
        k = h @ p["wk"] + p["bk"][0]
        v = h @ p["wv"] + p["bv"][0]

        def split(t):
            return t.reshape(B, S, NUM_HEADS, HEAD_DIM).transpose(0, 2, 1, 3)

        qh, kh, vh = split(q), split(k), split(v)
        scores = jnp.einsum("bhqd,bhkd->bhqk", qh, kh) / math.sqrt(HEAD_DIM)
        probs = jax.nn.softmax(scores, axis=-1)
        attn = jnp.einsum("bhqk,bhkd->bhqd", probs, vh)
        attn = attn.transpose(0, 2, 1, 3).reshape(B, S, D)
        attn = attn @ p["wo"] + p["bo"][0]

        x = attn + x
        x_res2 = x
        h2 = ln(x, p["ln2_g"], p["ln2_b"])
        m = h2 @ p["w1"] + p["b1"][0]
        m = jax.nn.gelu(m, approximate=False)
        m = m @ p["w2"] + p["b2"][0]
        return m + x_res2


if __name__ == "__main__":
    key = jax.random.PRNGKey(0)
    kx, kparams = jax.random.split(key)
    x = jax.random.normal(kx, (BATCH, SEQ, ENC_DIM), jnp.float32)
    params = init_params(kparams, ENC_DIM)

    out = jax.block_until_ready(encoder_forward(x, params))
    ref = jax.block_until_ready(encoder_ref(x, params))

    assert out.shape == (BATCH, SEQ, ENC_DIM)
    max_err = float(jnp.max(jnp.abs(out - ref)))
    assert jnp.allclose(out, ref, atol=1e-3, rtol=1e-3), max_err
    print("KERNEL_OK")
</pallas_src>

<mosaic_0001>
module attributes {stable_mosaic.version = 11 : i64} {
  func.func @_encoder_kernel(%arg0: memref<16x32xf32, #tpu.memory_space<vmem>>, %arg1: memref<8x128xf32, #tpu.memory_space<vmem>>, %arg2: memref<96x128xf32, #tpu.memory_space<vmem>>, %arg3: memref<128x32xf32, #tpu.memory_space<vmem>>, %arg4: memref<16x32xf32, #tpu.memory_space<vmem>>) attributes {dimension_semantics = [], scalar_prefetch = 0 : i64, scratch_operands = 0 : i64, tpu.core_type = #tpu.core_type<tc>} {
    %c0 = arith.constant 0 : index
    %c0_0 = arith.constant 0 : index
    %0 = vector.load %arg1[%c0, %c0_0] : memref<8x128xf32, #tpu.memory_space<vmem>>, vector<1x32xf32>
    %c1 = arith.constant 1 : index
    %c0_1 = arith.constant 0 : index
    %1 = vector.load %arg1[%c1, %c0_1] : memref<8x128xf32, #tpu.memory_space<vmem>>, vector<1x32xf32>
    %c2 = arith.constant 2 : index
    %c0_2 = arith.constant 0 : index
    %2 = vector.load %arg1[%c2, %c0_2] : memref<8x128xf32, #tpu.memory_space<vmem>>, vector<1x32xf32>
    %c3 = arith.constant 3 : index
    %c0_3 = arith.constant 0 : index
    %3 = vector.load %arg1[%c3, %c0_3] : memref<8x128xf32, #tpu.memory_space<vmem>>, vector<1x32xf32>
    %c4 = arith.constant 4 : index
    %c0_4 = arith.constant 0 : index
    %4 = vector.load %arg1[%c4, %c0_4] : memref<8x128xf32, #tpu.memory_space<vmem>>, vector<1x96xf32>
    %c5 = arith.constant 5 : index
    %c0_5 = arith.constant 0 : index
    %5 = vector.load %arg1[%c5, %c0_5] : memref<8x128xf32, #tpu.memory_space<vmem>>, vector<1x32xf32>
    %c6 = arith.constant 6 : index
    %c0_6 = arith.constant 0 : index
    %6 = vector.load %arg1[%c6, %c0_6] : memref<8x128xf32, #tpu.memory_space<vmem>>, vector<1x128xf32>
    %c7 = arith.constant 7 : index
    %c0_7 = arith.constant 0 : index
    %7 = vector.load %arg1[%c7, %c0_7] : memref<8x128xf32, #tpu.memory_space<vmem>>, vector<1x32xf32>
    %c0_8 = arith.constant 0 : index
    %c0_9 = arith.constant 0 : index
    %8 = vector.load %arg2[%c0_8, %c0_9] : memref<96x128xf32, #tpu.memory_space<vmem>>, vector<32x96xf32>
    %c32 = arith.constant 32 : index
    %c0_10 = arith.constant 0 : index
    %9 = vector.load %arg2[%c32, %c0_10] : memref<96x128xf32, #tpu.memory_space<vmem>>, vector<32x32xf32>
    %c64 = arith.constant 64 : index
    %c0_11 = arith.constant 0 : index
    %10 = vector.load %arg2[%c64, %c0_11] : memref<96x128xf32, #tpu.memory_space<vmem>>, vector<32x128xf32>
    %c0_12 = arith.constant 0 : index
    %c0_13 = arith.constant 0 : index
    %11 = vector.load %arg3[%c0_12, %c0_13] : memref<128x32xf32, #tpu.memory_space<vmem>>, vector<128x32xf32>
    %c0_14 = arith.constant 0 : index
    %c0_15 = arith.constant 0 : index
    %12 = vector.load %arg0[%c0_14, %c0_15] : memref<16x32xf32, #tpu.memory_space<vmem>>, vector<16x32xf32>
    %cst = arith.constant dense<0.000000e+00> : vector<16xf32>
    %13 = vector.multi_reduction <add>, %12, %cst [1] : vector<16x32xf32> to vector<16xf32>
    %14 = vector.shape_cast %13 : vector<16xf32> to vector<16x1xf32>
    %cst_16 = arith.constant 3.200000e+01 : f32
    %15 = vector.broadcast %cst_16 : f32 to vector<16x1xf32>
    %16 = arith.divf %14, %15 : vector<16x1xf32>
    %17 = vector.broadcast %16 : vector<16x1xf32> to vector<16x32xf32>
    %18 = arith.subf %12, %17 : vector<16x32xf32>
    %19 = arith.mulf %18, %18 : vector<16x32xf32>
    %cst_17 = arith.constant dense<0.000000e+00> : vector<16xf32>
    %20 = vector.multi_reduction <add>, %19, %cst_17 [1] : vector<16x32xf32> to vector<16xf32>
    %21 = vector.shape_cast %20 : vector<16xf32> to vector<16x1xf32>
    %cst_18 = arith.constant 3.200000e+01 : f32
    %22 = vector.broadcast %cst_18 : f32 to vector<16x1xf32>
    %23 = arith.divf %21, %22 : vector<16x1xf32>
    %24 = vector.broadcast %16 : vector<16x1xf32> to vector<16x32xf32>
    %25 = arith.subf %12, %24 : vector<16x32xf32>
    %cst_19 = arith.constant 9.99999974E-6 : f32
    %26 = vector.broadcast %cst_19 : f32 to vector<16x1xf32>
    %27 = arith.addf %23, %26 : vector<16x1xf32>
    %28 = math.rsqrt %27 : vector<16x1xf32>
    %29 = vector.broadcast %28 : vector<16x1xf32> to vector<16x32xf32>
    %30 = arith.mulf %25, %29 : vector<16x32xf32>
    %31 = vector.broadcast %0 : vector<1x32xf32> to vector<16x32xf32>
    %32 = arith.mulf %30, %31 : vector<16x32xf32>
    %33 = vector.broadcast %1 : vector<1x32xf32> to vector<16x32xf32>
    %34 = arith.addf %32, %33 : vector<16x32xf32>
    %cst_20 = arith.constant dense<0.000000e+00> : vector<16x96xf32>
    %35 = tpu.matmul %34, %8, %cst_20 {dimension_numbers = #tpu.dot_dimension_numbers<[1], [0], [0], [1], [0, 0, 1, 1], [], []>} : vector<16x32xf32>, vector<32x96xf32>, vector<16x96xf32> -> vector<16x96xf32>
    %36 = vector.broadcast %4 : vector<1x96xf32> to vector<16x96xf32>
    %37 = arith.addf %35, %36 : vector<16x96xf32>
    %38 = vector.extract_strided_slice %37 {offsets = [0, 0], sizes = [16, 24], strides = [1, 1]} : vector<16x96xf32> to vector<16x24xf32>
    %39 = vector.extract_strided_slice %37 {offsets = [0, 24], sizes = [16, 24], strides = [1, 1]} : vector<16x96xf32> to vector<16x24xf32>
    %40 = vector.extract_strided_slice %37 {offsets = [0, 48], sizes = [16, 24], strides = [1, 1]} : vector<16x96xf32> to vector<16x24xf32>
    %41 = vector.extract_strided_slice %37 {offsets = [0, 72], sizes = [16, 24], strides = [1, 1]} : vector<16x96xf32> to vector<16x24xf32>
    %42 = tpu.concatenate %38, %39, %40, %41 in 0 : vector<16x24xf32>, vector<16x24xf32>, vector<16x24xf32>, vector<16x24xf32> -> vector<64x24xf32>
    %43 = vector.shape_cast %42 : vector<64x24xf32> to vector<8x8x24xf32>
    %44 = vector.extract_strided_slice %43 {offsets = [0, 0, 0], sizes = [8, 8, 8], strides = [1, 1, 1]} : vector<8x8x24xf32> to vector<8x8x8xf32>
    %45 = vector.extract_strided_slice %43 {offsets = [0, 0, 8], sizes = [8, 8, 8], strides = [1, 1, 1]} : vector<8x8x24xf32> to vector<8x8x8xf32>
    %46 = vector.extract_strided_slice %43 {offsets = [0, 0, 16], sizes = [8, 8, 8], strides = [1, 1, 1]} : vector<8x8x24xf32> to vector<8x8x8xf32>
    "tpu.trace_start"() <{level = 10 : i32, message = "bqd,bkd->bqk"}> : () -> ()
    %cst_21 = arith.constant dense<0.000000e+00> : vector<8x8x8xf32>
    %47 = tpu.matmul %44, %45, %cst_21 {dimension_numbers = #tpu.dot_dimension_numbers<[2], [2], [1], [1], [0, 0, 0, 1, 1, 1], [0], [0]>} : vector<8x8x8xf32>, vector<8x8x8xf32>, vector<8x8x8xf32> -> vector<8x8x8xf32>
    "tpu.trace_stop"() : () -> ()
    %cst_22 = arith.constant dense<0xFF800000> : vector<8x8xf32>
    %48 = vector.multi_reduction <maximumf>, %47, %cst_22 [2] : vector<8x8x8xf32> to vector<8x8xf32>
    %49 = vector.shape_cast %48 : vector<8x8xf32> to vector<8x8x1xf32>
    %50 = vector.broadcast %49 : vector<8x8x1xf32> to vector<8x8x8xf32>
    %51 = arith.subf %47, %50 : vector<8x8x8xf32>
    %52 = math.exp %51 : vector<8x8x8xf32>
    %cst_23 = arith.constant dense<0.000000e+00> : vector<8x8xf32>
    %53 = vector.multi_reduction <add>, %52, %cst_23 [2] : vector<8x8x8xf32> to vector<8x8xf32>
    %54 = vector.shape_cast %53 : vector<8x8xf32> to vector<8x8x1xf32>
    %55 = tpu.reciprocal %54 {approx = true} : vector<8x8x1xf32> -> vector<8x8x1xf32>
    %56 = arith.mulf %54, %55 : vector<8x8x1xf32>
    %cst_24 = arith.constant 2.000000e+00 : f32
    %57 = vector.broadcast %cst_24 : f32 to vector<8x8x1xf32>
    %58 = arith.subf %57, %56 : vector<8x8x1xf32>
    %59 = arith.mulf %55, %58 : vector<8x8x1xf32>
    %60 = vector.broadcast %59 : vector<8x8x1xf32> to vector<8x8x8xf32>
    %61 = arith.mulf %52, %60 : vector<8x8x8xf32>
    "tpu.trace_start"() <{level = 10 : i32, message = "bqk,bkd->bqd"}> : () -> ()
    %cst_25 = arith.constant dense<0.000000e+00> : vector<8x8x8xf32>
    %62 = tpu.matmul %61, %46, %cst_25 {dimension_numbers = #tpu.dot_dimension_numbers<[2], [1], [1], [2], [0, 0, 0, 1, 1, 2], [0], [0]>} : vector<8x8x8xf32>, vector<8x8x8xf32>, vector<8x8x8xf32> -> vector<8x8x8xf32>
    "tpu.trace_stop"() : () -> ()
    %63 = vector.extract_strided_slice %62 {offsets = [0, 0, 0], sizes = [2, 8, 8], strides = [1, 1, 1]} : vector<8x8x8xf32> to vector<2x8x8xf32>
    %64 = vector.shape_cast %63 : vector<2x8x8xf32> to vector<16x8xf32>
    %65 = vector.extract_strided_slice %62 {offsets = [2, 0, 0], sizes = [2, 8, 8], strides = [1, 1, 1]} : vector<8x8x8xf32> to vector<2x8x8xf32>
    %66 = vector.shape_cast %65 : vector<2x8x8xf32> to vector<16x8xf32>
    %67 = vector.extract_strided_slice %62 {offsets = [4, 0, 0], sizes = [2, 8, 8], strides = [1, 1, 1]} : vector<8x8x8xf32> to vector<2x8x8xf32>
    %68 = vector.shape_cast %67 : vector<2x8x8xf32> to vector<16x8xf32>
    %69 = vector.extract_strided_slice %62 {offsets = [6, 0, 0], sizes = [2, 8, 8], strides = [1, 1, 1]} : vector<8x8x8xf32> to vector<2x8x8xf32>
    %70 = vector.shape_cast %69 : vector<2x8x8xf32> to vector<16x8xf32>
    %71 = tpu.concatenate %64, %66, %68, %70 in 1 : vector<16x8xf32>, vector<16x8xf32>, vector<16x8xf32>, vector<16x8xf32> -> vector<16x32xf32>
    %cst_26 = arith.constant dense<0.000000e+00> : vector<16x32xf32>
    %72 = tpu.matmul %71, %9, %cst_26 {dimension_numbers = #tpu.dot_dimension_numbers<[1], [0], [0], [1], [0, 0, 1, 1], [], []>} : vector<16x32xf32>, vector<32x32xf32>, vector<16x32xf32> -> vector<16x32xf32>
    %73 = vector.broadcast %5 : vector<1x32xf32> to vector<16x32xf32>
    %74 = arith.addf %72, %73 : vector<16x32xf32>
    %75 = arith.addf %74, %12 : vector<16x32xf32>
    %cst_27 = arith.constant dense<0.000000e+00> : vector<16xf32>
    %76 = vector.multi_reduction <add>, %75, %cst_27 [1] : vector<16x32xf32> to vector<16xf32>
    %77 = vector.shape_cast %76 : vector<16xf32> to vector<16x1xf32>
    %cst_28 = arith.constant 3.200000e+01 : f32
    %78 = vector.broadcast %cst_28 : f32 to vector<16x1xf32>
    %79 = arith.divf %77, %78 : vector<16x1xf32>
    %80 = vector.broadcast %79 : vector<16x1xf32> to vector<16x32xf32>
    %81 = arith.subf %75, %80 : vector<16x32xf32>
    %82 = arith.mulf %81, %81 : vector<16x32xf32>
    %cst_29 = arith.constant dense<0.000000e+00> : vector<16xf32>
    %83 = vector.multi_reduction <add>, %82, %cst_29 [1] : vector<16x32xf32> to vector<16xf32>
    %84 = vector.shape_cast %83 : vector<16xf32> to vector<16x1xf32>
    %cst_30 = arith.constant 3.200000e+01 : f32
    %85 = vector.broadcast %cst_30 : f32 to vector<16x1xf32>
    %86 = arith.divf %84, %85 : vector<16x1xf32>
    %87 = vector.broadcast %79 : vector<16x1xf32> to vector<16x32xf32>
    %88 = arith.subf %75, %87 : vector<16x32xf32>
    %cst_31 = arith.constant 9.99999974E-6 : f32
    %89 = vector.broadcast %cst_31 : f32 to vector<16x1xf32>
    %90 = arith.addf %86, %89 : vector<16x1xf32>
    %91 = math.rsqrt %90 : vector<16x1xf32>
    %92 = vector.broadcast %91 : vector<16x1xf32> to vector<16x32xf32>
    %93 = arith.mulf %88, %92 : vector<16x32xf32>
    %94 = vector.broadcast %2 : vector<1x32xf32> to vector<16x32xf32>
    %95 = arith.mulf %93, %94 : vector<16x32xf32>
    %96 = vector.broadcast %3 : vector<1x32xf32> to vector<16x32xf32>
    %97 = arith.addf %95, %96 : vector<16x32xf32>
    %cst_32 = arith.constant dense<0.000000e+00> : vector<16x128xf32>
    %98 = tpu.matmul %97, %10, %cst_32 {dimension_numbers = #tpu.dot_dimension_numbers<[1], [0], [0], [1], [0, 0, 1, 1], [], []>} : vector<16x32xf32>, vector<32x128xf32>, vector<16x128xf32> -> vector<16x128xf32>
    %99 = vector.broadcast %6 : vector<1x128xf32> to vector<16x128xf32>
    %100 = arith.addf %98, %99 : vector<16x128xf32>
    %cst_33 = arith.constant 0.707106769 : f32
    %101 = vector.broadcast %cst_33 : f32 to vector<16x128xf32>
    %102 = arith.mulf %100, %101 : vector<16x128xf32>
    %103 = math.absf %102 : vector<16x128xf32>
    %cst_34 = arith.constant 0.327591091 : f32
    %104 = vector.broadcast %cst_34 : f32 to vector<16x128xf32>
    %105 = arith.mulf %104, %103 : vector<16x128xf32>
    %cst_35 = arith.constant 1.000000e+00 : f32
    %106 = vector.broadcast %cst_35 : f32 to vector<16x128xf32>
    %107 = arith.addf %106, %105 : vector<16x128xf32>
    %cst_36 = arith.constant 1.000000e+00 : f32
    %108 = vector.broadcast %cst_36 : f32 to vector<16x128xf32>
    %109 = arith.divf %108, %107 : vector<16x128xf32>
    %cst_37 = arith.constant 1.06140542 : f32
    %110 = vector.broadcast %cst_37 : f32 to vector<16x128xf32>
    %111 = arith.mulf %109, %110 : vector<16x128xf32>
    %cst_38 = arith.constant -1.45315206 : f32
    %112 = vector.broadcast %cst_38 : f32 to vector<16x128xf32>
    %113 = arith.addf %112, %111 : vector<16x128xf32>
    %114 = arith.mulf %109, %113 : vector<16x128xf32>
    %cst_39 = arith.constant 1.42141378 : f32
    %115 = vector.broadcast %cst_39 : f32 to vector<16x128xf32>
    %116 = arith.addf %115, %114 : vector<16x128xf32>
    %117 = arith.mulf %109, %116 : vector<16x128xf32>
    %cst_40 = arith.constant -0.284496725 : f32
    %118 = vector.broadcast %cst_40 : f32 to vector<16x128xf32>
    %119 = arith.addf %118, %117 : vector<16x128xf32>
    %120 = arith.mulf %109, %119 : vector<16x128xf32>
    %cst_41 = arith.constant 0.254829586 : f32
    %121 = vector.broadcast %cst_41 : f32 to vector<16x128xf32>
    %122 = arith.addf %121, %120 : vector<16x128xf32>
    %123 = arith.mulf %109, %122 : vector<16x128xf32>
    %cst_42 = arith.constant 5.000000e-01 : f32
    %124 = vector.broadcast %cst_42 : f32 to vector<16x128xf32>
    %125 = arith.mulf %124, %123 : vector<16x128xf32>
    %cst_43 = arith.constant 0.000000e+00 : f32
    %126 = vector.broadcast %cst_43 : f32 to vector<16x128xf32>
    %127 = arith.subf %126, %102 : vector<16x128xf32>
    %128 = arith.mulf %127, %102 : vector<16x128xf32>
    %129 = math.exp %128 : vector<16x128xf32>
    %130 = arith.mulf %125, %129 : vector<16x128xf32>
    %cst_44 = arith.constant 0.000000e+00 : f32
    %131 = vector.broadcast %cst_44 : f32 to vector<16x128xf32>
    %132 = arith.cmpf oge, %102, %131 : vector<16x128xf32>
    %cst_45 = arith.constant 1.000000e+00 : f32
    %133 = vector.broadcast %cst_45 : f32 to vector<16x128xf32>
    %134 = arith.subf %133, %130 : vector<16x128xf32>
    %135 = arith.select %132, %134, %130 : vector<16x128xi1>, vector<16x128xf32>
    %136 = arith.mulf %100, %135 : vector<16x128xf32>
    %cst_46 = arith.constant dense<0.000000e+00> : vector<16x32xf32>
    %137 = tpu.matmul %136, %11, %cst_46 {dimension_numbers = #tpu.dot_dimension_numbers<[1], [0], [0], [1], [0, 0, 1, 1], [], []>} : vector<16x128xf32>, vector<128x32xf32>, vector<16x32xf32> -> vector<16x32xf32>
    %138 = vector.broadcast %7 : vector<1x32xf32> to vector<16x32xf32>
    %139 = arith.addf %137, %138 : vector<16x32xf32>
    %140 = arith.addf %139, %75 : vector<16x32xf32>
    %c0_47 = arith.constant 0 : index
    %c0_48 = arith.constant 0 : index
    %141 = vector.load %arg4[%c0_47, %c0_48] : memref<16x32xf32, #tpu.memory_space<vmem>>, vector<16x32xf32>
    tpu.vector_store %arg4[%c0_47, %c0_48], %140 {strides = array<i32>} : memref<16x32xf32, #tpu.memory_space<vmem>>, vector<16x32xf32>,
    return
  }
}

</mosaic_0001>

<llo_original>
// kernel: tpu_custom_call.1
$region0: #{tpu_custom_call.1}
  #allocation0 [shape = 'u32[]', space=smem, size = 0x4, offset = 0x4, fixed_abs, tag = 'smem constant byte address 0x4 - core index']
  #allocation1 [shape = 'u32[144,128]{1,0:T(1,128)}', space=vmem, size = 0x12000, scoped, tag = 'internal scratch']
  %s0 = inlined_call_operand.vmem [shape: f32[16,32], index: 0, kind: input, shape index: {}]
  %s1 = inlined_call_operand.vmem [shape: f32[8,128], index: 1, kind: input, shape index: {}]
  %s2 = inlined_call_operand.vmem [shape: f32[96,128], index: 2, kind: input, shape index: {}]
  %s3 = inlined_call_operand.vmem [shape: f32[128,32], index: 3, kind: input, shape index: {}]
  %s4 = inlined_call_operand.hbm [shape: f32[16,32], index: 4, kind: output, shape index: {}]
  %s5 = sld [smem:[#allocation0]]
  $region26: #{tpu_custom_call.1} parent=0
    _
  %s7 = ssub.s32 1, %s5
  %s8 = scalar_select 0, %s7, %s5
  $region1: #{tpu_custom_call.1} parent=0
    #allocation2 [shape = 'u8[8192]{0}', space=vmem, size = 0x2000, scoped, tag = 'output window, operand 0, single buffered']
    #allocation3 [shape = 's32[1]{0}', space=sflag, size = 0x4, scoped, tag = 'scoped memory for tpu_custom_call.1']
    %9 = vsyncpa [#allocation3], 0
    // Predicated region
    $region2: #{tpu_custom_call.1} parent=1 // pred_check
      _
    $region3: #{tpu_custom_call.1} parent=1 // pred_check_branch
      %11 = sbr.rel (0) target = $region5
    $region4: #{tpu_custom_call.1} parent=1 // pred_region
      _
    $region5: #{tpu_custom_call.1} parent=1 // pred_fallthru
      _
    // Predicated region
    $region6: #{tpu_custom_call.1} parent=1 // pred_check
      _
    $region7: #{tpu_custom_call.1} parent=1 // pred_check_branch
      %13 = sbr.rel (0) target = $region9
    $region8: #{tpu_custom_call.1} parent=1 // pred_region
      _
    $region9: #{tpu_custom_call.1} parent=1 // pred_fallthru
      _
    // Predicated region
    $region10: #{tpu_custom_call.1} parent=1 // pred_check
      _
    $region11: #{tpu_custom_call.1} parent=1 // pred_check_branch
      %15 = sbr.rel (0) target = $region13
    $region12: #{tpu_custom_call.1} parent=1 // pred_region
      _
    $region13: #{tpu_custom_call.1} parent=1 // pred_fallthru
      _
    // Predicated region
    $region14: #{tpu_custom_call.1} parent=1 // pred_check
      _
    $region15: #{tpu_custom_call.1} parent=1 // pred_check_branch
      %17 = sbr.rel (0) target = $region17
    $region16: #{tpu_custom_call.1} parent=1 // pred_region
      _
    $region17: #{tpu_custom_call.1} parent=1 // pred_fallthru
      _
    %v18 = vld [vmem:[%s1] sm:$0x1]
    %v19 = vld [vmem:[%s1 + $0x1] sm:$0x1]
    %v20 = vld [vmem:[%s1 + $0x2] sm:$0x1]
    %v21 = vld [vmem:[%s1 + $0x3] sm:$0x1]
    %v22 = vld [vmem:[%s1 + $0x4] sm:$0x1]
    %v23 = vld [vmem:[%s1 + $0x5] sm:$0x1]
    %v24 = vld [vmem:[%s1 + $0x6] sm:$0x1]
    %v25 = vld [vmem:[%s1 + $0x7] sm:$0x1]
    %v26 = vld [vmem:[%s2] sm:$0xff]
    %v27 = vld [vmem:[%s2 + $0x8] sm:$0xff]
    %v28 = vld [vmem:[%s2 + $0x10] sm:$0xff]
    %v29 = vld [vmem:[%s2 + $0x18] sm:$0xff]
    %v30 = vld [vmem:[%s2 + $0x20] sm:$0xff]
    %v31 = vld [vmem:[%s2 + $0x28] sm:$0xff]
    %v32 = vld [vmem:[%s2 + $0x30] sm:$0xff]
    %v33 = vld [vmem:[%s2 + $0x38] sm:$0xff]
    %v34 = vld [vmem:[%s2 + $0x40] sm:$0xff]
    %v35 = vld [vmem:[%s2 + $0x48] sm:$0xff]
    %v36 = vld [vmem:[%s2 + $0x50] sm:$0xff]
    %v37 = vld [vmem:[%s2 + $0x58] sm:$0xff]
    %v38 = vld [vmem:[%s3] sm:$0xff]
    %v39 = vld [vmem:[%s3 + $0x8] sm:$0xff]
    %v40 = vld [vmem:[%s3 + $0x10] sm:$0xff]
    %v41 = vld [vmem:[%s3 + $0x18] sm:$0xff]
    %v42 = vld [vmem:[%s3 + $0x20] sm:$0xff]
    %v43 = vld [vmem:[%s3 + $0x28] sm:$0xff]
    %v44 = vld [vmem:[%s3 + $0x30] sm:$0xff]
    %v45 = vld [vmem:[%s3 + $0x38] sm:$0xff]
    %v46 = vld [vmem:[%s3 + $0x40] sm:$0xff]
    %v47 = vld [vmem:[%s3 + $0x48] sm:$0xff]
    %v48 = vld [vmem:[%s3 + $0x50] sm:$0xff]
    %v49 = vld [vmem:[%s3 + $0x58] sm:$0xff]
    %v50 = vld [vmem:[%s3 + $0x60] sm:$0xff]
    %v51 = vld [vmem:[%s3 + $0x68] sm:$0xff]
    %v52 = vld [vmem:[%s3 + $0x70] sm:$0xff]
    %v53 = vld [vmem:[%s3 + $0x78] sm:$0xff]
    %v54 = vld [vmem:[%s0] sm:$0xff]
    %v55 = vld [vmem:[%s0 + $0x8] sm:$0xff]
    %vm56 = vcmask 261120
    %v57 = vsel %vm56, %v54, 0.0
    %58 = vadd.xlane.f32.xlu0 %v57
    %v59 = vpop.xlane.xlu0 %58
    %v60 = vsel %vm56, %v55, 0.0
    %61 = vadd.xlane.f32.xlu0 %v60
    %v62 = vpop.xlane.xlu0 %61
    %v63 = vrcp.pop 32.0
    %v64 = vmul.f32 %v59, %v63
    %v65 = vmul.f32 %v62, %v63
    %v66 = vsub.f32 %v54, %v64
    %v67 = vsub.f32 %v55, %v65
    %v68 = vmul.f32 %v66, %v66
    %v69 = vmul.f32 %v67, %v67
    %v70 = vsel %vm56, %v68, 0.0
    %71 = vadd.xlane.f32.xlu0 %v70
    %v72 = vpop.xlane.xlu0 %71
    %v73 = vsel %vm56, %v69, 0.0
    %74 = vadd.xlane.f32.xlu0 %v73
    %v75 = vpop.xlane.xlu0 %74
    %v76 = vmul.f32 %v72, %v63
    %v77 = vmul.f32 %v75, %v63
    %v78 = vadd.f32 %v76, 1e-05
    %v79 = vadd.f32 %v77, 1e-05
    %v80 = vrsqrt.pop %v78
    %v81 = vrsqrt.pop %v79
    %v82 = vmul.f32 %v66, %v80
    %v83 = vmul.f32 %v67, %v81
    %v84 = vlaneseq
    %v85 = vshrl.u32 %v84, 7
    %v86 = vsub.s32 0, %v85
    %v87 = vrot.slane %v18, %v86
    %v88 = vmul.f32 %v82, %v87
    %v89 = vmul.f32 %v83, %v87
    %v90 = vlaneseq
    %v91 = vshrl.u32 %v90, 7
    %v92 = vsub.s32 0, %v91
    %v93 = vrot.slane %v19, %v92
    %v94 = vadd.f32 %v88, %v93
    %v95 = vadd.f32 %v89, %v93
    %v96 = vlaneseq
    %v97 = vshrl.u32 %v96, 7
    %v98 = vsub.s32 0, %v97
    %v99 = vrot.slane %v22, %v98
    %v101 = vsel %vm56, %v94, 0
    %v104 = vsel %vm56, %v95, 0
    %106 = vmatprep.subr.mxu0 0.0
    %107 = vmatpush1.msra.mxu0 0.0
    %108 = vmatprep.subr.mxu0 0.0
    %109 = vmatpush1.msra.mxu0 0.0
    %110 = vmatprep.subr.mxu0 0.0
    %111 = vmatpush1.msra.mxu0 0.0
    %112 = vmatprep.subr.mxu0 0.0
    %113 = vmatpush1.msra.mxu0 0.0
    %114 = vmatprep.subr.mxu0 0.0
    %115 = vmatpush1.msra.mxu0 0.0
    %116 = vmatprep.subr.mxu0 0.0
    %117 = vmatpush1.msra.mxu0 0.0
    %118 = vmatprep.subr.mxu0 0.0
    %119 = vmatpush1.msra.mxu0 0.0
    %120 = vmatprep.subr.mxu0 0.0
    %121 = vmatpush1.msra.mxu0 0.0
    %122 = vmatprep.subr.mxu0 0.0
    %123 = vmatpush1.msra.mxu0 0.0
    %124 = vmatprep.subr.mxu0 0.0
    %125 = vmatpush1.msra.mxu0 0.0
    %126 = vmatprep.subr.mxu0 0.0
    %127 = vmatpush1.msra.mxu0 0.0
    %128 = vmatprep.subr.mxu0 0.0
    %129 = vmatpush1.msra.mxu0 0.0
    %130 = vmatprep.subr.mxu0 0.0
    %131 = vmatpush1.msra.mxu0 %v29
    %132 = vmatprep.subr.mxu0 0.0
    %133 = vmatpush1.msra.mxu0 %v28
    %134 = vmatprep.subr.mxu0 0.0
    %135 = vmatpush1.msra.mxu0 %v27
    %136 = vmatprep.subr.mxu0 0.0
    %137 = vmatpush1.msra.mxu0 %v26
    %138 = vmatprep.subr.mxu0 0.0
    %139 = vmatpush2.msra.mxu0 0.0
    %140 = vmatprep.subr.mxu0 0.0
    %141 = vmatpush2.msra.mxu0 0.0
    %142 = vmatprep.subr.mxu0 0.0
    %143 = vmatpush2.msra.mxu0 0.0
    %144 = vmatprep.subr.mxu0 0.0
    %145 = vmatpush2.msra.mxu0 0.0
    %146 = vmatprep.subr.mxu0 0.0
    %147 = vmatpush2.msra.mxu0 0.0
    %148 = vmatprep.subr.mxu0 0.0
    %149 = vmatpush2.msra.mxu0 0.0
    %150 = vmatprep.subr.mxu0 0.0
    %151 = vmatpush2.msra.mxu0 0.0
    %152 = vmatprep.subr.mxu0 0.0
    %153 = vmatpush2.msra.mxu0 0.0
    %154 = vmatprep.subr.mxu0 0.0
    %155 = vmatpush2.msra.mxu0 0.0
    %156 = vmatprep.subr.mxu0 0.0
    %157 = vmatpush2.msra.mxu0 0.0
    %158 = vmatprep.subr.mxu0 0.0
    %159 = vmatpush2.msra.mxu0 0.0
    %160 = vmatprep.subr.mxu0 0.0
    %161 = vmatpush2.msra.mxu0 0.0
    %162 = vmatprep.subr.mxu0 0.0
    %163 = vmatpush2.msra.mxu0 0.0
    %164 = vmatprep.subr.mxu0 0.0
    %165 = vmatpush2.msra.mxu0 0.0
    %166 = vmatprep.subr.mxu0 0.0
    %167 = vmatpush2.msra.mxu0 0.0
    %168 = vmatprep.subr.mxu0 0.0
    %169 = vmatpush2.msra.mxu0 0.0
    %170 = vmatprep.mubr.f32.mxu0 0.0
    %171 = vmatmul.mubr.f32.gmra.mxu0 %v101
    %v172 = vpop.f32.mrf.mxu0
    %v173 = vadd.f32 %v99, %v172
    %v174 = vpop.f32.mrf.mxu0
    %175 = vmatprep.mubr.f32.mxu0 0.0
    %176 = vmatmul.mubr.f32.gmra.mxu0 %v104
    %v177 = vpop.f32.mrf.mxu0
    %v178 = vadd.f32 %v99, %v177
    %v179 = vpop.f32.mrf.mxu0
    %180 = vdwg.mxu0
    %183 = vrot.lane.b32.xlu0 %v173, 104
    %v184 = vpop.permute.xlu0 %183
    %185 = vrot.lane.b32.xlu0 %v178, 104
    %v186 = vpop.permute.xlu0 %185
    %187 = vrot.lane.b32.xlu0 %v173, 80
    %v188 = vpop.permute.xlu0 %187
    %189 = vrot.lane.b32.xlu0 %v178, 80
    %v190 = vpop.permute.xlu0 %189
    %191 = vrot.lane.b32.xlu0 %v173, 56
    %v192 = vpop.permute.xlu0 %191
    %193 = vrot.lane.b32.xlu0 %v178, 56
    %v194 = vpop.permute.xlu0 %193
    %195 = vrot.lane.b32.xlu0 %v173, 120
    %v196 = vpop.permute.xlu0 %195
    %vm197 = vcmask 64512
    %v198 = vsel %vm197, %v173, 0
    %v200 = vsel %vm197, %v196, 0
    %202 = vmatprep.subr.mxu0 0.0
    %203 = vmatpush1.xpose.msra.mxu0 0.0
    %204 = vmatprep.subr.mxu0 0.0
    %205 = vmatpush1.xpose.msra.mxu0 0.0
    %206 = vmatprep.subr.mxu0 0.0
    %207 = vmatpush1.xpose.msra.mxu0 0.0
    %208 = vmatprep.subr.mxu0 0.0
    %209 = vmatpush1.xpose.msra.mxu0 0.0
    %210 = vmatprep.subr.mxu0 0.0
    %211 = vmatpush1.xpose.msra.mxu0 0.0
    %212 = vmatprep.subr.mxu0 0.0
    %213 = vmatpush1.xpose.msra.mxu0 0.0
    %214 = vmatprep.subr.mxu0 0.0
    %215 = vmatpush1.xpose.msra.mxu0 0.0
    %216 = vmatprep.subr.mxu0 0.0
    %217 = vmatpush1.xpose.msra.mxu0 0.0
    %218 = vmatprep.subr.mxu0 0.0
    %219 = vmatpush1.xpose.msra.mxu0 0.0
    %220 = vmatprep.subr.mxu0 0.0
    %221 = vmatpush1.xpose.msra.mxu0 0.0
    %222 = vmatprep.subr.mxu0 0.0
    %223 = vmatpush1.xpose.msra.mxu0 0.0
    %224 = vmatprep.subr.mxu0 0.0
    %225 = vmatpush1.xpose.msra.mxu0 0.0
    %226 = vmatprep.subr.mxu0 0.0
    %227 = vmatpush1.xpose.msra.mxu0 0.0
    %228 = vmatprep.subr.mxu0 0.0
    %229 = vmatpush1.xpose.msra.mxu0 0.0
    %230 = vmatprep.subr.mxu0 0.0
    %231 = vmatpush1.xpose.msra.mxu0 0.0
    %232 = vmatprep.subr.mxu0 0.0
    %233 = vmatpush1.xpose.msra.mxu0 %v200
    %234 = vmatprep.subr.mxu0 0.0
    %235 = vmatpush2.xpose.msra.mxu0 0.0
    %236 = vmatprep.subr.mxu0 0.0
    %237 = vmatpush2.xpose.msra.mxu0 0.0
    %238 = vmatprep.subr.mxu0 0.0
    %239 = vmatpush2.xpose.msra.mxu0 0.0
    %240 = vmatprep.subr.mxu0 0.0
    %241 = vmatpush2.xpose.msra.mxu0 0.0
    %242 = vmatprep.subr.mxu0 0.0
    %243 = vmatpush2.xpose.msra.mxu0 0.0
    %244 = vmatprep.subr.mxu0 0.0
    %245 = vmatpush2.xpose.msra.mxu0 0.0
    %246 = vmatprep.subr.mxu0 0.0
    %247 = vmatpush2.xpose.msra.mxu0 0.0
    %248 = vmatprep.subr.mxu0 0.0
    %249 = vmatpush2.xpose.msra.mxu0 0.0
    %250 = vmatprep.subr.mxu0 0.0
    %251 = vmatpush2.xpose.msra.mxu0 0.0
    %252 = vmatprep.subr.mxu0 0.0
    %253 = vmatpush2.xpose.msra.mxu0 0.0
    %254 = vmatprep.subr.mxu0 0.0
    %255 = vmatpush2.xpose.msra.mxu0 0.0
    %256 = vmatprep.subr.mxu0 0.0
    %257 = vmatpush2.xpose.msra.mxu0 0.0
    %258 = vmatprep.subr.mxu0 0.0
    %259 = vmatpush2.xpose.msra.mxu0 0.0
    %260 = vmatprep.subr.mxu0 0.0
    %261 = vmatpush2.xpose.msra.mxu0 0.0
    %262 = vmatprep.subr.mxu0 0.0
    %263 = vmatpush2.xpose.msra.mxu0 0.0
    %264 = vmatprep.subr.mxu0 0.0
    %265 = vmatpush2.xpose.msra.mxu0 0.0
    %266 = vmatprep.mubr.f32.mxu0 0.0
    %267 = vmatmul.mubr.f32.gmra.mxu0 %v198
    %v268 = vpop.f32.mrf.mxu0
    %v269 = vadd.f32 0.0, %v268
    %v270 = vpop.f32.mrf.mxu0
    %271 = vdwg.mxu0
    %272 = vrot.lane.b32.xlu0 %v178, 120
    %v273 = vpop.permute.xlu0 %272
    %v274 = vsel %vm197, %v178, 0
    %v276 = vsel %vm197, %v273, 0
    %278 = vmatprep.subr.mxu0 0.0
    %279 = vmatpush1.xpose.msra.mxu0 0.0
    %280 = vmatprep.subr.mxu0 0.0
    %281 = vmatpush1.xpose.msra.mxu0 0.0
    %282 = vmatprep.subr.mxu0 0.0
    %283 = vmatpush1.xpose.msra.mxu0 0.0
    %284 = vmatprep.subr.mxu0 0.0
    %285 = vmatpush1.xpose.msra.mxu0 0.0
    %286 = vmatprep.subr.mxu0 0.0
    %287 = vmatpush1.xpose.msra.mxu0 0.0
    %288 = vmatprep.subr.mxu0 0.0
    %289 = vmatpush1.xpose.msra.mxu0 0.0
    %290 = vmatprep.subr.mxu0 0.0
    %291 = vmatpush1.xpose.msra.mxu0 0.0
    %292 = vmatprep.subr.mxu0 0.0
    %293 = vmatpush1.xpose.msra.mxu0 0.0
    %294 = vmatprep.subr.mxu0 0.0
    %295 = vmatpush1.xpose.msra.mxu0 0.0
    %296 = vmatprep.subr.mxu0 0.0
    %297 = vmatpush1.xpose.msra.mxu0 0.0
    %298 = vmatprep.subr.mxu0 0.0
    %299 = vmatpush1.xpose.msra.mxu0 0.0
    %300 = vmatprep.subr.mxu0 0.0
    %301 = vmatpush1.xpose.msra.mxu0 0.0
    %302 = vmatprep.subr.mxu0 0.0
    %303 = vmatpush1.xpose.msra.mxu0 0.0
    %304 = vmatprep.subr.mxu0 0.0
    %305 = vmatpush1.xpose.msra.mxu0 0.0
    %306 = vmatprep.subr.mxu0 0.0
    %307 = vmatpush1.xpose.msra.mxu0 0.0
    %308 = vmatprep.subr.mxu0 0.0
    %309 = vmatpush1.xpose.msra.mxu0 %v276
    %310 = vmatprep.subr.mxu0 0.0
    %311 = vmatpush2.xpose.msra.mxu0 0.0
    %312 = vmatprep.subr.mxu0 0.0
    %313 = vmatpush2.xpose.msra.mxu0 0.0
    %314 = vmatprep.subr.mxu0 0.0
    %315 = vmatpush2.xpose.msra.mxu0 0.0
    %316 = vmatprep.subr.mxu0 0.0
    %317 = vmatpush2.xpose.msra.mxu0 0.0
    %318 = vmatprep.subr.mxu0 0.0
    %319 = vmatpush2.xpose.msra.mxu0 0.0
    %320 = vmatprep.subr.mxu0 0.0
    %321 = vmatpush2.xpose.msra.mxu0 0.0
    %322 = vmatprep.subr.mxu0 0.0
    %323 = vmatpush2.xpose.msra.mxu0 0.0
    %324 = vmatprep.subr.mxu0 0.0
    %325 = vmatpush2.xpose.msra.mxu0 0.0
    %326 = vmatprep.subr.mxu0 0.0
    %327 = vmatpush2.xpose.msra.mxu0 0.0
    %328 = vmatprep.subr.mxu0 0.0
    %329 = vmatpush2.xpose.msra.mxu0 0.0
    %330 = vmatprep.subr.mxu0 0.0
    %331 = vmatpush2.xpose.msra.mxu0 0.0
    %332 = vmatprep.subr.mxu0 0.0
    %333 = vmatpush2.xpose.msra.mxu0 0.0
    %334 = vmatprep.subr.mxu0 0.0
    %335 = vmatpush2.xpose.msra.mxu0 0.0
    %336 = vmatprep.subr.mxu0 0.0
    %337 = vmatpush2.xpose.msra.mxu0 0.0
    %338 = vmatprep.subr.mxu0 0.0
    %339 = vmatpush2.xpose.msra.mxu0 0.0
    %340 = vmatprep.subr.mxu0 0.0
    %341 = vmatpush2.xpose.msra.mxu0 0.0
    %342 = vmatprep.mubr.f32.mxu0 0.0
    %343 = vmatmul.mubr.f32.gmra.mxu0 %v274
    %v344 = vpop.f32.mrf.mxu0
    %v345 = vadd.f32 0.0, %v344
    %v346 = vpop.f32.mrf.mxu0
    %347 = vdwg.mxu0
    %348 = vrot.lane.b32.xlu0 %v184, 120
    %v349 = vpop.permute.xlu0 %348
    %v350 = vsel %vm197, %v184, 0
    %v352 = vsel %vm197, %v349, 0
    %354 = vmatprep.subr.mxu0 0.0
    %355 = vmatpush1.xpose.msra.mxu0 0.0
    %356 = vmatprep.subr.mxu0 0.0
    %357 = vmatpush1.xpose.msra.mxu0 0.0
    %358 = vmatprep.subr.mxu0 0.0
    %359 = vmatpush1.xpose.msra.mxu0 0.0
    %360 = vmatprep.subr.mxu0 0.0
    %361 = vmatpush1.xpose.msra.mxu0 0.0
    %362 = vmatprep.subr.mxu0 0.0
    %363 = vmatpush1.xpose.msra.mxu0 0.0
    %364 = vmatprep.subr.mxu0 0.0
    %365 = vmatpush1.xpose.msra.mxu0 0.0
    %366 = vmatprep.subr.mxu0 0.0
    %367 = vmatpush1.xpose.msra.mxu0 0.0
    %368 = vmatprep.subr.mxu0 0.0
    %369 = vmatpush1.xpose.msra.mxu0 0.0
    %370 = vmatprep.subr.mxu0 0.0
    %371 = vmatpush1.xpose.msra.mxu0 0.0
    %372 = vmatprep.subr.mxu0 0.0
    %373 = vmatpush1.xpose.msra.mxu0 0.0
    %374 = vmatprep.subr.mxu0 0.0
    %375 = vmatpush1.xpose.msra.mxu0 0.0
    %376 = vmatprep.subr.mxu0 0.0
    %377 = vmatpush1.xpose.msra.mxu0 0.0
    %378 = vmatprep.subr.mxu0 0.0
    %379 = vmatpush1.xpose.msra.mxu0 0.0
    %380 = vmatprep.subr.mxu0 0.0
    %381 = vmatpush1.xpose.msra.mxu0 0.0
    %382 = vmatprep.subr.mxu0 0.0
    %383 = vmatpush1.xpose.msra.mxu0 0.0
    %384 = vmatprep.subr.mxu0 0.0
    %385 = vmatpush1.xpose.msra.mxu0 %v352
    %386 = vmatprep.subr.mxu0 0.0
    %387 = vmatpush2.xpose.msra.mxu0 0.0
    %388 = vmatprep.subr.mxu0 0.0
    %389 = vmatpush2.xpose.msra.mxu0 0.0
    %390 = vmatprep.subr.mxu0 0.0
    %391 = vmatpush2.xpose.msra.mxu0 0.0
    %392 = vmatprep.subr.mxu0 0.0
    %393 = vmatpush2.xpose.msra.mxu0 0.0
    %394 = vmatprep.subr.mxu0 0.0
    %395 = vmatpush2.xpose.msra.mxu0 0.0
    %396 = vmatprep.subr.mxu0 0.0
    %397 = vmatpush2.xpose.msra.mxu0 0.0
    %398 = vmatprep.subr.mxu0 0.0
    %399 = vmatpush2.xpose.msra.mxu0 0.0
    %400 = vmatprep.subr.mxu0 0.0
    %401 = vmatpush2.xpose.msra.mxu0 0.0
    %402 = vmatprep.subr.mxu0 0.0
    %403 = vmatpush2.xpose.msra.mxu0 0.0
    %404 = vmatprep.subr.mxu0 0.0
    %405 = vmatpush2.xpose.msra.mxu0 0.0
    %406 = vmatprep.subr.mxu0 0.0
    %407 = vmatpush2.xpose.msra.mxu0 0.0
    %408 = vmatprep.subr.mxu0 0.0
    %409 = vmatpush2.xpose.msra.mxu0 0.0
    %410 = vmatprep.subr.mxu0 0.0
    %411 = vmatpush2.xpose.msra.mxu0 0.0
    %412 = vmatprep.subr.mxu0 0.0
    %413 = vmatpush2.xpose.msra.mxu0 0.0
    %414 = vmatprep.subr.mxu0 0.0
    %415 = vmatpush2.xpose.msra.mxu0 0.0
    %416 = vmatprep.subr.mxu0 0.0
    %417 = vmatpush2.xpose.msra.mxu0 0.0
    %418 = vmatprep.mubr.f32.mxu0 0.0
    %419 = vmatmul.mubr.f32.gmra.mxu0 %v350
    %v420 = vpop.f32.mrf.mxu0
    %v421 = vadd.f32 0.0, %v420
    %v422 = vpop.f32.mrf.mxu0
    %423 = vdwg.mxu0
    %424 = vrot.lane.b32.xlu0 %v186, 120
    %v425 = vpop.permute.xlu0 %424
    %v426 = vsel %vm197, %v186, 0
    %v428 = vsel %vm197, %v425, 0
    %430 = vmatprep.subr.mxu0 0.0
    %431 = vmatpush1.xpose.msra.mxu0 0.0
    %432 = vmatprep.subr.mxu0 0.0
    %433 = vmatpush1.xpose.msra.mxu0 0.0
    %434 = vmatprep.subr.mxu0 0.0
    %435 = vmatpush1.xpose.msra.mxu0 0.0
    %436 = vmatprep.subr.mxu0 0.0
    %437 = vmatpush1.xpose.msra.mxu0 0.0
    %438 = vmatprep.subr.mxu0 0.0
    %439 = vmatpush1.xpose.msra.mxu0 0.0
    %440 = vmatprep.subr.mxu0 0.0
    %441 = vmatpush1.xpose.msra.mxu0 0.0
    %442 = vmatprep.subr.mxu0 0.0
    %443 = vmatpush1.xpose.msra.mxu0 0.0
    %444 = vmatprep.subr.mxu0 0.0
    %445 = vmatpush1.xpose.msra.mxu0 0.0
    %446 = vmatprep.subr.mxu0 0.0
    %447 = vmatpush1.xpose.msra.mxu0 0.0
    %448 = vmatprep.subr.mxu0 0.0
    %449 = vmatpush1.xpose.msra.mxu0 0.0
    %450 = vmatprep.subr.mxu0 0.0
    %451 = vmatpush1.xpose.msra.mxu0 0.0
    %452 = vmatprep.subr.mxu0 0.0
    %453 = vmatpush1.xpose.msra.mxu0 0.0
    %454 = vmatprep.subr.mxu0 0.0
    %455 = vmatpush1.xpose.msra.mxu0 0.0
    %456 = vmatprep.subr.mxu0 0.0
    %457 = vmatpush1.xpose.msra.mxu0 0.0
    %458 = vmatprep.subr.mxu0 0.0
    %459 = vmatpush1.xpose.msra.mxu0 0.0
    %460 = vmatprep.subr.mxu0 0.0
    %461 = vmatpush1.xpose.msra.mxu0 %v428
    %462 = vmatprep.subr.mxu0 0.0
    %463 = vmatpush2.xpose.msra.mxu0 0.0
    %464 = vmatprep.subr.mxu0 0.0
    %465 = vmatpush2.xpose.msra.mxu0 0.0
    %466 = vmatprep.subr.mxu0 0.0
    %467 = vmatpush2.xpose.msra.mxu0 0.0
    %468 = vmatprep.subr.mxu0 0.0
    %469 = vmatpush2.xpose.msra.mxu0 0.0
    %470 = vmatprep.subr.mxu0 0.0
    %471 = vmatpush2.xpose.msra.mxu0 0.0
    %472 = vmatprep.subr.mxu0 0.0
    %473 = vmatpush2.xpose.msra.mxu0 0.0
    %474 = vmatprep.subr.mxu0 0.0
    %475 = vmatpush2.xpose.msra.mxu0 0.0
    %476 = vmatprep.subr.mxu0 0.0
    %477 = vmatpush2.xpose.msra.mxu0 0.0
    %478 = vmatprep.subr.mxu0 0.0
    %479 = vmatpush2.xpose.msra.mxu0 0.0
    %480 = vmatprep.subr.mxu0 0.0
    %481 = vmatpush2.xpose.msra.mxu0 0.0
    %482 = vmatprep.subr.mxu0 0.0
    %483 = vmatpush2.xpose.msra.mxu0 0.0
    %484 = vmatprep.subr.mxu0 0.0
    %485 = vmatpush2.xpose.msra.mxu0 0.0
    %486 = vmatprep.subr.mxu0 0.0
    %487 = vmatpush2.xpose.msra.mxu0 0.0
    %488 = vmatprep.subr.mxu0 0.0
    %489 = vmatpush2.xpose.msra.mxu0 0.0
    %490 = vmatprep.subr.mxu0 0.0
    %491 = vmatpush2.xpose.msra.mxu0 0.0
    %492 = vmatprep.subr.mxu0 0.0
    %493 = vmatpush2.xpose.msra.mxu0 0.0
    %494 = vmatprep.mubr.f32.mxu0 0.0
    %495 = vmatmul.mubr.f32.gmra.mxu0 %v426
    %v496 = vpop.f32.mrf.mxu0
    %v497 = vadd.f32 0.0, %v496
    %v498 = vpop.f32.mrf.mxu0
    %499 = vdwg.mxu0
    %500 = vrot.lane.b32.xlu0 %v188, 120
    %v501 = vpop.permute.xlu0 %500
    %v502 = vsel %vm197, %v188, 0
    %v504 = vsel %vm197, %v501, 0
    %506 = vmatprep.subr.mxu0 0.0
    %507 = vmatpush1.xpose.msra.mxu0 0.0
    %508 = vmatprep.subr.mxu0 0.0
    %509 = vmatpush1.xpose.msra.mxu0 0.0
    %510 = vmatprep.subr.mxu0 0.0
    %511 = vmatpush1.xpose.msra.mxu0 0.0
    %512 = vmatprep.subr.mxu0 0.0
    %513 = vmatpush1.xpose.msra.mxu0 0.0
    %514 = vmatprep.subr.mxu0 0.0
    %515 = vmatpush1.xpose.msra.mxu0 0.0
    %516 = vmatprep.subr.mxu0 0.0
    %517 = vmatpush1.xpose.msra.mxu0 0.0
    %518 = vmatprep.subr.mxu0 0.0
    %519 = vmatpush1.xpose.msra.mxu0 0.0
    %520 = vmatprep.subr.mxu0 0.0
    %521 = vmatpush1.xpose.msra.mxu0 0.0
    %522 = vmatprep.subr.mxu0 0.0
    %523 = vmatpush1.xpose.msra.mxu0 0.0
    %524 = vmatprep.subr.mxu0 0.0
    %525 = vmatpush1.xpose.msra.mxu0 0.0
    %526 = vmatprep.subr.mxu0 0.0
    %527 = vmatpush1.xpose.msra.mxu0 0.0
    %528 = vmatprep.subr.mxu0 0.0
    %529 = vmatpush1.xpose.msra.mxu0 0.0
    %530 = vmatprep.subr.mxu0 0.0
    %531 = vmatpush1.xpose.msra.mxu0 0.0
    %532 = vmatprep.subr.mxu0 0.0
    %533 = vmatpush1.xpose.msra.mxu0 0.0
    %534 = vmatprep.subr.mxu0 0.0
    %535 = vmatpush1.xpose.msra.mxu0 0.0
    %536 = vmatprep.subr.mxu0 0.0
    %537 = vmatpush1.xpose.msra.mxu0 %v504
    %538 = vmatprep.subr.mxu0 0.0
    %539 = vmatpush2.xpose.msra.mxu0 0.0
    %540 = vmatprep.subr.mxu0 0.0
    %541 = vmatpush2.xpose.msra.mxu0 0.0
    %542 = vmatprep.subr.mxu0 0.0
    %543 = vmatpush2.xpose.msra.mxu0 0.0
    %544 = vmatprep.subr.mxu0 0.0
    %545 = vmatpush2.xpose.msra.mxu0 0.0
    %546 = vmatprep.subr.mxu0 0.0
    %547 = vmatpush2.xpose.msra.mxu0 0.0
    %548 = vmatprep.subr.mxu0 0.0
    %549 = vmatpush2.xpose.msra.mxu0 0.0
    %550 = vmatprep.subr.mxu0 0.0
    %551 = vmatpush2.xpose.msra.mxu0 0.0
    %552 = vmatprep.subr.mxu0 0.0
    %553 = vmatpush2.xpose.msra.mxu0 0.0
    %554 = vmatprep.subr.mxu0 0.0
    %555 = vmatpush2.xpose.msra.mxu0 0.0
    %556 = vmatprep.subr.mxu0 0.0
    %557 = vmatpush2.xpose.msra.mxu0 0.0
    %558 = vmatprep.subr.mxu0 0.0
    %559 = vmatpush2.xpose.msra.mxu0 0.0
    %560 = vmatprep.subr.mxu0 0.0
    %561 = vmatpush2.xpose.msra.mxu0 0.0
    %562 = vmatprep.subr.mxu0 0.0
    %563 = vmatpush2.xpose.msra.mxu0 0.0
    %564 = vmatprep.subr.mxu0 0.0
    %565 = vmatpush2.xpose.msra.mxu0 0.0
    %566 = vmatprep.subr.mxu0 0.0
    %567 = vmatpush2.xpose.msra.mxu0 0.0
    %568 = vmatprep.subr.mxu0 0.0
    %569 = vmatpush2.xpose.msra.mxu0 0.0
    %570 = vmatprep.mubr.f32.mxu0 0.0
    %571 = vmatmul.mubr.f32.gmra.mxu0 %v502
    %v572 = vpop.f32.mrf.mxu0
    %v573 = vadd.f32 0.0, %v572
    %v574 = vpop.f32.mrf.mxu0
    %575 = vdwg.mxu0
    %576 = vrot.lane.b32.xlu0 %v190, 120
    %v577 = vpop.permute.xlu0 %576
    %v578 = vsel %vm197, %v190, 0
    %v580 = vsel %vm197, %v577, 0
    %582 = vmatprep.subr.mxu0 0.0
    %583 = vmatpush1.xpose.msra.mxu0 0.0
    %584 = vmatprep.subr.mxu0 0.0
    %585 = vmatpush1.xpose.msra.mxu0 0.0
    %586 = vmatprep.subr.mxu0 0.0
    %587 = vmatpush1.xpose.msra.mxu0 0.0
    %588 = vmatprep.subr.mxu0 0.0
    %589 = vmatpush1.xpose.msra.mxu0 0.0
    %590 = vmatprep.subr.mxu0 0.0
    %591 = vmatpush1.xpose.msra.mxu0 0.0
    %592 = vmatprep.subr.mxu0 0.0
    %593 = vmatpush1.xpose.msra.mxu0 0.0
    %594 = vmatprep.subr.mxu0 0.0
    %595 = vmatpush1.xpose.msra.mxu0 0.0
    %596 = vmatprep.subr.mxu0 0.0
    %597 = vmatpush1.xpose.msra.mxu0 0.0
    %598 = vmatprep.subr.mxu0 0.0
    %599 = vmatpush1.xpose.msra.mxu0 0.0
    %600 = vmatprep.subr.mxu0 0.0
    %601 = vmatpush1.xpose.msra.mxu0 0.0
    %602 = vmatprep.subr.mxu0 0.0
    %603 = vmatpush1.xpose.msra.mxu0 0.0
    %604 = vmatprep.subr.mxu0 0.0
    %605 = vmatpush1.xpose.msra.mxu0 0.0
    %606 = vmatprep.subr.mxu0 0.0
    %607 = vmatpush1.xpose.msra.mxu0 0.0
    %608 = vmatprep.subr.mxu0 0.0
    %609 = vmatpush1.xpose.msra.mxu0 0.0
    %610 = vmatprep.subr.mxu0 0.0
    %611 = vmatpush1.xpose.msra.mxu0 0.0
    %612 = vmatprep.subr.mxu0 0.0
    %613 = vmatpush1.xpose.msra.mxu0 %v580
    %614 = vmatprep.subr.mxu0 0.0
    %615 = vmatpush2.xpose.msra.mxu0 0.0
    %616 = vmatprep.subr.mxu0 0.0
    %617 = vmatpush2.xpose.msra.mxu0 0.0
    %618 = vmatprep.subr.mxu0 0.0
    %619 = vmatpush2.xpose.msra.mxu0 0.0
    %620 = vmatprep.subr.mxu0 0.0
    %621 = vmatpush2.xpose.msra.mxu0 0.0
    %622 = vmatprep.subr.mxu0 0.0
    %623 = vmatpush2.xpose.msra.mxu0 0.0
    %624 = vmatprep.subr.mxu0 0.0
    %625 = vmatpush2.xpose.msra.mxu0 0.0
    %626 = vmatprep.subr.mxu0 0.0
    %627 = vmatpush2.xpose.msra.mxu0 0.0
    %628 = vmatprep.subr.mxu0 0.0
    %629 = vmatpush2.xpose.msra.mxu0 0.0
    %630 = vmatprep.subr.mxu0 0.0
    %631 = vmatpush2.xpose.msra.mxu0 0.0
    %632 = vmatprep.subr.mxu0 0.0
    %633 = vmatpush2.xpose.msra.mxu0 0.0
    %634 = vmatprep.subr.mxu0 0.0
    %635 = vmatpush2.xpose.msra.mxu0 0.0
    %636 = vmatprep.subr.mxu0 0.0
    %637 = vmatpush2.xpose.msra.mxu0 0.0
    %638 = vmatprep.subr.mxu0 0.0
    %639 = vmatpush2.xpose.msra.mxu0 0.0
    %640 = vmatprep.subr.mxu0 0.0
    %641 = vmatpush2.xpose.msra.mxu0 0.0
    %642 = vmatprep.subr.mxu0 0.0
    %643 = vmatpush2.xpose.msra.mxu0 0.0
    %644 = vmatprep.subr.mxu0 0.0
    %645 = vmatpush2.xpose.msra.mxu0 0.0
    %646 = vmatprep.mubr.f32.mxu0 0.0
    %647 = vmatmul.mubr.f32.gmra.mxu0 %v578
    %v648 = vpop.f32.mrf.mxu0
    %v649 = vadd.f32 0.0, %v648
    %v650 = vpop.f32.mrf.mxu0
    %651 = vdwg.mxu0
    %652 = vrot.lane.b32.xlu0 %v192, 120
    %v653 = vpop.permute.xlu0 %652
    %v654 = vsel %vm197, %v192, 0
    %v656 = vsel %vm197, %v653, 0
    %658 = vmatprep.subr.mxu0 0.0
    %659 = vmatpush1.xpose.msra.mxu0 0.0
    %660 = vmatprep.subr.mxu0 0.0
    %661 = vmatpush1.xpose.msra.mxu0 0.0
    %662 = vmatprep.subr.mxu0 0.0
    %663 = vmatpush1.xpose.msra.mxu0 0.0
    %664 = vmatprep.subr.mxu0 0.0
    %665 = vmatpush1.xpose.msra.mxu0 0.0
    %666 = vmatprep.subr.mxu0 0.0
    %667 = vmatpush1.xpose.msra.mxu0 0.0
    %668 = vmatprep.subr.mxu0 0.0
    %669 = vmatpush1.xpose.msra.mxu0 0.0
    %670 = vmatprep.subr.mxu0 0.0
    %671 = vmatpush1.xpose.msra.mxu0 0.0
    %672 = vmatprep.subr.mxu0 0.0
    %673 = vmatpush1.xpose.msra.mxu0 0.0
    %674 = vmatprep.subr.mxu0 0.0
    %675 = vmatpush1.xpose.msra.mxu0 0.0
    %676 = vmatprep.subr.mxu0 0.0
    %677 = vmatpush1.xpose.msra.mxu0 0.0
    %678 = vmatprep.subr.mxu0 0.0
    %679 = vmatpush1.xpose.msra.mxu0 0.0
    %680 = vmatprep.subr.mxu0 0.0
    %681 = vmatpush1.xpose.msra.mxu0 0.0
    %682 = vmatprep.subr.mxu0 0.0
    %683 = vmatpush1.xpose.msra.mxu0 0.0
    %684 = vmatprep.subr.mxu0 0.0
    %685 = vmatpush1.xpose.msra.mxu0 0.0
    %686 = vmatprep.subr.mxu0 0.0
    %687 = vmatpush1.xpose.msra.mxu0 0.0
    %688 = vmatprep.subr.mxu0 0.0
    %689 = vmatpush1.xpose.msra.mxu0 %v656
    %690 = vmatprep.subr.mxu0 0.0
    %691 = vmatpush2.xpose.msra.mxu0 0.0
    %692 = vmatprep.subr.mxu0 0.0
    %693 = vmatpush2.xpose.msra.mxu0 0.0
    %694 = vmatprep.subr.mxu0 0.0
    %695 = vmatpush2.xpose.msra.mxu0 0.0
    %696 = vmatprep.subr.mxu0 0.0
    %697 = vmatpush2.xpose.msra.mxu0 0.0
    %698 = vmatprep.subr.mxu0 0.0
    %699 = vmatpush2.xpose.msra.mxu0 0.0
    %700 = vmatprep.subr.mxu0 0.0
    %701 = vmatpush2.xpose.msra.mxu0 0.0
    %702 = vmatprep.subr.mxu0 0.0
    %703 = vmatpush2.xpose.msra.mxu0 0.0
    %704 = vmatprep.subr.mxu0 0.0
    %705 = vmatpush2.xpose.msra.mxu0 0.0
    %706 = vmatprep.subr.mxu0 0.0
    %707 = vmatpush2.xpose.msra.mxu0 0.0
    %708 = vmatprep.subr.mxu0 0.0
    %709 = vmatpush2.xpose.msra.mxu0 0.0
    %710 = vmatprep.subr.mxu0 0.0
    %711 = vmatpush2.xpose.msra.mxu0 0.0
    %712 = vmatprep.subr.mxu0 0.0
    %713 = vmatpush2.xpose.msra.mxu0 0.0
    %714 = vmatprep.subr.mxu0 0.0
    %715 = vmatpush2.xpose.msra.mxu0 0.0
    %716 = vmatprep.subr.mxu0 0.0
    %717 = vmatpush2.xpose.msra.mxu0 0.0
    %718 = vmatprep.subr.mxu0 0.0
    %719 = vmatpush2.xpose.msra.mxu0 0.0
    %720 = vmatprep.subr.mxu0 0.0
    %721 = vmatpush2.xpose.msra.mxu0 0.0
    %722 = vmatprep.mubr.f32.mxu0 0.0
    %723 = vmatmul.mubr.f32.gmra.mxu0 %v654
    %v724 = vpop.f32.mrf.mxu0
    %v725 = vadd.f32 0.0, %v724
    %v726 = vpop.f32.mrf.mxu0
    %727 = vdwg.mxu0
    %728 = vrot.lane.b32.xlu0 %v194, 120
    %v729 = vpop.permute.xlu0 %728
    %v730 = vsel %vm197, %v194, 0
    %v732 = vsel %vm197, %v729, 0
    %734 = vmatprep.subr.mxu0 0.0
    %735 = vmatpush1.xpose.msra.mxu0 0.0
    %736 = vmatprep.subr.mxu0 0.0
    %737 = vmatpush1.xpose.msra.mxu0 0.0
    %738 = vmatprep.subr.mxu0 0.0
    %739 = vmatpush1.xpose.msra.mxu0 0.0
    %740 = vmatprep.subr.mxu0 0.0
    %741 = vmatpush1.xpose.msra.mxu0 0.0
    %742 = vmatprep.subr.mxu0 0.0
    %743 = vmatpush1.xpose.msra.mxu0 0.0
    %744 = vmatprep.subr.mxu0 0.0
    %745 = vmatpush1.xpose.msra.mxu0 0.0
    %746 = vmatprep.subr.mxu0 0.0
    %747 = vmatpush1.xpose.msra.mxu0 0.0
    %748 = vmatprep.subr.mxu0 0.0
    %749 = vmatpush1.xpose.msra.mxu0 0.0
    %750 = vmatprep.subr.mxu0 0.0
    %751 = vmatpush1.xpose.msra.mxu0 0.0
    %752 = vmatprep.subr.mxu0 0.0
    %753 = vmatpush1.xpose.msra.mxu0 0.0
    %754 = vmatprep.subr.mxu0 0.0
    %755 = vmatpush1.xpose.msra.mxu0 0.0
    %756 = vmatprep.subr.mxu0 0.0
    %757 = vmatpush1.xpose.msra.mxu0 0.0
    %758 = vmatprep.subr.mxu0 0.0
    %759 = vmatpush1.xpose.msra.mxu0 0.0
    %760 = vmatprep.subr.mxu0 0.0
    %761 = vmatpush1.xpose.msra.mxu0 0.0
    %762 = vmatprep.subr.mxu0 0.0
    %763 = vmatpush1.xpose.msra.mxu0 0.0
    %764 = vmatprep.subr.mxu0 0.0
    %765 = vmatpush1.xpose.msra.mxu0 %v732
    %766 = vmatprep.subr.mxu0 0.0
    %767 = vmatpush2.xpose.msra.mxu0 0.0
    %768 = vmatprep.subr.mxu0 0.0
    %769 = vmatpush2.xpose.msra.mxu0 0.0
    %770 = vmatprep.subr.mxu0 0.0
    %771 = vmatpush2.xpose.msra.mxu0 0.0
    %772 = vmatprep.subr.mxu0 0.0
    %773 = vmatpush2.xpose.msra.mxu0 0.0
    %774 = vmatprep.subr.mxu0 0.0
    %775 = vmatpush2.xpose.msra.mxu0 0.0
    %776 = vmatprep.subr.mxu0 0.0
    %777 = vmatpush2.xpose.msra.mxu0 0.0
    %778 = vmatprep.subr.mxu0 0.0
    %779 = vmatpush2.xpose.msra.mxu0 0.0
    %780 = vmatprep.subr.mxu0 0.0
    %781 = vmatpush2.xpose.msra.mxu0 0.0
    %782 = vmatprep.subr.mxu0 0.0
    %783 = vmatpush2.xpose.msra.mxu0 0.0
    %784 = vmatprep.subr.mxu0 0.0
    %785 = vmatpush2.xpose.msra.mxu0 0.0
    %786 = vmatprep.subr.mxu0 0.0
    %787 = vmatpush2.xpose.msra.mxu0 0.0
    %788 = vmatprep.subr.mxu0 0.0
    %789 = vmatpush2.xpose.msra.mxu0 0.0
    %790 = vmatprep.subr.mxu0 0.0
    %791 = vmatpush2.xpose.msra.mxu0 0.0
    %792 = vmatprep.subr.mxu0 0.0
    %793 = vmatpush2.xpose.msra.mxu0 0.0
    %794 = vmatprep.subr.mxu0 0.0
    %795 = vmatpush2.xpose.msra.mxu0 0.0
    %796 = vmatprep.subr.mxu0 0.0
    %797 = vmatpush2.xpose.msra.mxu0 0.0
    %798 = vmatprep.mubr.f32.mxu0 0.0
    %799 = vmatmul.mubr.f32.gmra.mxu0 %v730
    %v800 = vpop.f32.mrf.mxu0
    %v801 = vadd.f32 0.0, %v800
    %v802 = vpop.f32.mrf.mxu0
    %803 = vdwg.mxu0
    %v804 = vsel %vm197, %v269, -inf
    %805 = vmax.xlane.f32.xlu0 %v804
    %v806 = vpop.xlane.xlu0 %805
    %v807 = vsel %vm197, %v345, -inf
    %808 = vmax.xlane.f32.xlu0 %v807
    %v809 = vpop.xlane.xlu0 %808
    %v810 = vsel %vm197, %v421, -inf
    %811 = vmax.xlane.f32.xlu0 %v810
    %v812 = vpop.xlane.xlu0 %811
    %v813 = vsel %vm197, %v497, -inf
    %814 = vmax.xlane.f32.xlu0 %v813
    %v815 = vpop.xlane.xlu0 %814
    %v816 = vsel %vm197, %v573, -inf
    %817 = vmax.xlane.f32.xlu0 %v816
    %v818 = vpop.xlane.xlu0 %817
    %v819 = vsel %vm197, %v649, -inf
    %820 = vmax.xlane.f32.xlu0 %v819
    %v821 = vpop.xlane.xlu0 %820
    %v822 = vsel %vm197, %v725, -inf
    %823 = vmax.xlane.f32.xlu0 %v822
    %v824 = vpop.xlane.xlu0 %823
    %v825 = vsel %vm197, %v801, -inf
    %826 = vmax.xlane.f32.xlu0 %v825
    %v827 = vpop.xlane.xlu0 %826
    %v828 = vsub.f32 %v269, %v806
    %v829 = vsub.f32 %v345, %v809
    %v830 = vsub.f32 %v421, %v812
    %v831 = vsub.f32 %v497, %v815
    %v832 = vsub.f32 %v573, %v818
    %v833 = vsub.f32 %v649, %v821
    %v834 = vsub.f32 %v725, %v824
    %v835 = vsub.f32 %v801, %v827
    %v836 = vmul.f32 %v828, 1.442695
    %v837 = vpow.pop %v836
    %v838 = vmul.f32 %v829, 1.442695
    %v839 = vpow.pop %v838
    %v840 = vmul.f32 %v830, 1.442695
    %v841 = vpow.pop %v840
    %v842 = vmul.f32 %v831, 1.442695
    %v843 = vpow.pop %v842
    %v844 = vmul.f32 %v832, 1.442695
    %v845 = vpow.pop %v844
    %v846 = vmul.f32 %v833, 1.442695
    %v847 = vpow.pop %v846
    %v848 = vmul.f32 %v834, 1.442695
    %v849 = vpow.pop %v848
    %v850 = vmul.f32 %v835, 1.442695
    %v851 = vpow.pop %v850
    %v852 = vsel %vm197, %v837, 0.0
    %853 = vadd.xlane.f32.xlu0 %v852
    %v854 = vpop.xlane.xlu0 %853
    %v855 = vsel %vm197, %v839, 0.0
    %856 = vadd.xlane.f32.xlu0 %v855
    %v857 = vpop.xlane.xlu0 %856
    %v858 = vsel %vm197, %v841, 0.0
    %859 = vadd.xlane.f32.xlu0 %v858
    %v860 = vpop.xlane.xlu0 %859
    %v861 = vsel %vm197, %v843, 0.0
    %862 = vadd.xlane.f32.xlu0 %v861
    %v863 = vpop.xlane.xlu0 %862
    %v864 = vsel %vm197, %v845, 0.0
    %865 = vadd.xlane.f32.xlu0 %v864
    %v866 = vpop.xlane.xlu0 %865
    %v867 = vsel %vm197, %v847, 0.0
    %868 = vadd.xlane.f32.xlu0 %v867
    %v869 = vpop.xlane.xlu0 %868
    %v870 = vsel %vm197, %v849, 0.0
    %871 = vadd.xlane.f32.xlu0 %v870
    %v872 = vpop.xlane.xlu0 %871
    %v873 = vsel %vm197, %v851, 0.0
    %874 = vadd.xlane.f32.xlu0 %v873
    %v875 = vpop.xlane.xlu0 %874
    %v876 = vrcp.pop %v854
    %v877 = vrcp.pop %v857
    %v878 = vrcp.pop %v860
    %v879 = vrcp.pop %v863
    %v880 = vrcp.pop %v866
    %v881 = vrcp.pop %v869
    %v882 = vrcp.pop %v872
    %v883 = vrcp.pop %v875
    %v884 = vmul.f32 %v854, %v876
    %v885 = vmul.f32 %v857, %v877
    %v886 = vmul.f32 %v860, %v878
    %v887 = vmul.f32 %v863, %v879
    %v888 = vmul.f32 %v866, %v880
    %v889 = vmul.f32 %v869, %v881
    %v890 = vmul.f32 %v872, %v882
    %v891 = vmul.f32 %v875, %v883
    %v892 = vsub.f32 2.0, %v884
    %v893 = vsub.f32 2.0, %v885
    %v894 = vsub.f32 2.0, %v886
    %v895 = vsub.f32 2.0, %v887
    %v896 = vsub.f32 2.0, %v888
    %v897 = vsub.f32 2.0, %v889
    %v898 = vsub.f32 2.0, %v890
    %v899 = vsub.f32 2.0, %v891
    %v900 = vmul.f32 %v876, %v892
    %v901 = vmul.f32 %v877, %v893
    %v902 = vmul.f32 %v878, %v894
    %v903 = vmul.f32 %v879, %v895
    %v904 = vmul.f32 %v880, %v896
    %v905 = vmul.f32 %v881, %v897
    %v906 = vmul.f32 %v882, %v898
    %v907 = vmul.f32 %v883, %v899
    %v908 = vmul.f32 %v837, %v900
    %v909 = vmul.f32 %v839, %v901
    %v910 = vmul.f32 %v841, %v902
    %v911 = vmul.f32 %v843, %v903
    %v912 = vmul.f32 %v845, %v904
    %v913 = vmul.f32 %v847, %v905
    %v914 = vmul.f32 %v849, %v906
    %v915 = vmul.f32 %v851, %v907
    %916 = vrot.lane.b32.xlu0 %v173, 112
    %v917 = vpop.permute.xlu0 %916
    %v920 = vsel %vm197, %v908, 0
    %922 = vmatprep.subr.mxu0 0.0
    %923 = vmatpush1.msra.mxu0 0.0
    %924 = vmatprep.subr.mxu0 0.0
    %925 = vmatpush1.msra.mxu0 0.0
    %926 = vmatprep.subr.mxu0 0.0
    %927 = vmatpush1.msra.mxu0 0.0
    %928 = vmatprep.subr.mxu0 0.0
    %929 = vmatpush1.msra.mxu0 0.0
    %930 = vmatprep.subr.mxu0 0.0
    %931 = vmatpush1.msra.mxu0 0.0
    %932 = vmatprep.subr.mxu0 0.0
    %933 = vmatpush1.msra.mxu0 0.0
    %934 = vmatprep.subr.mxu0 0.0
    %935 = vmatpush1.msra.mxu0 0.0
    %936 = vmatprep.subr.mxu0 0.0
    %937 = vmatpush1.msra.mxu0 0.0
    %938 = vmatprep.subr.mxu0 0.0
    %939 = vmatpush1.msra.mxu0 0.0
    %940 = vmatprep.subr.mxu0 0.0
    %941 = vmatpush1.msra.mxu0 0.0
    %942 = vmatprep.subr.mxu0 0.0
    %943 = vmatpush1.msra.mxu0 0.0
    %944 = vmatprep.subr.mxu0 0.0
    %945 = vmatpush1.msra.mxu0 0.0
    %946 = vmatprep.subr.mxu0 0.0
    %947 = vmatpush1.msra.mxu0 0.0
    %948 = vmatprep.subr.mxu0 0.0
    %949 = vmatpush1.msra.mxu0 0.0
    %950 = vmatprep.subr.mxu0 0.0
    %951 = vmatpush1.msra.mxu0 0.0
    %952 = vmatprep.subr.mxu0 0.0
    %953 = vmatpush1.msra.mxu0 %v917
    %954 = vmatprep.subr.mxu0 0.0
    %955 = vmatpush2.msra.mxu0 0.0
    %956 = vmatprep.subr.mxu0 0.0
    %957 = vmatpush2.msra.mxu0 0.0
    %958 = vmatprep.subr.mxu0 0.0
    %959 = vmatpush2.msra.mxu0 0.0
    %960 = vmatprep.subr.mxu0 0.0
    %961 = vmatpush2.msra.mxu0 0.0
    %962 = vmatprep.subr.mxu0 0.0
    %963 = vmatpush2.msra.mxu0 0.0
    %964 = vmatprep.subr.mxu0 0.0
    %965 = vmatpush2.msra.mxu0 0.0
    %966 = vmatprep.subr.mxu0 0.0
    %967 = vmatpush2.msra.mxu0 0.0
    %968 = vmatprep.subr.mxu0 0.0
    %969 = vmatpush2.msra.mxu0 0.0
    %970 = vmatprep.subr.mxu0 0.0
    %971 = vmatpush2.msra.mxu0 0.0
    %972 = vmatprep.subr.mxu0 0.0
    %973 = vmatpush2.msra.mxu0 0.0
    %974 = vmatprep.subr.mxu0 0.0
    %975 = vmatpush2.msra.mxu0 0.0
    %976 = vmatprep.subr.mxu0 0.0
    %977 = vmatpush2.msra.mxu0 0.0
    %978 = vmatprep.subr.mxu0 0.0
    %979 = vmatpush2.msra.mxu0 0.0
    %980 = vmatprep.subr.mxu0 0.0
    %981 = vmatpush2.msra.mxu0 0.0
    %982 = vmatprep.subr.mxu0 0.0
    %983 = vmatpush2.msra.mxu0 0.0
    %984 = vmatprep.subr.mxu0 0.0
    %985 = vmatpush2.msra.mxu0 0.0
    %986 = vmatprep.mubr.f32.mxu0 0.0
    %987 = vmatmul.mubr.f32.gmra.mxu0 %v920
    %v988 = vpop.f32.mrf.mxu0
    %v989 = vadd.f32 0.0, %v988
    %v990 = vpop.f32.mrf.mxu0
    %991 = vdwg.mxu0
    %992 = vrot.lane.b32.xlu0 %v178, 112
    %v993 = vpop.permute.xlu0 %992
    %v996 = vsel %vm197, %v909, 0
    %998 = vmatprep.subr.mxu0 0.0
    %999 = vmatpush1.msra.mxu0 0.0
    %1000 = vmatprep.subr.mxu0 0.0
    %1001 = vmatpush1.msra.mxu0 0.0
    %1002 = vmatprep.subr.mxu0 0.0
    %1003 = vmatpush1.msra.mxu0 0.0
    %1004 = vmatprep.subr.mxu0 0.0
    %1005 = vmatpush1.msra.mxu0 0.0
    %1006 = vmatprep.subr.mxu0 0.0
    %1007 = vmatpush1.msra.mxu0 0.0
    %1008 = vmatprep.subr.mxu0 0.0
    %1009 = vmatpush1.msra.mxu0 0.0
    %1010 = vmatprep.subr.mxu0 0.0
    %1011 = vmatpush1.msra.mxu0 0.0
    %1012 = vmatprep.subr.mxu0 0.0
    %1013 = vmatpush1.msra.mxu0 0.0
    %1014 = vmatprep.subr.mxu0 0.0
    %1015 = vmatpush1.msra.mxu0 0.0
    %1016 = vmatprep.subr.mxu0 0.0
    %1017 = vmatpush1.msra.mxu0 0.0
    %1018 = vmatprep.subr.mxu0 0.0
    %1019 = vmatpush1.msra.mxu0 0.0
    %1020 = vmatprep.subr.mxu0 0.0
    %1021 = vmatpush1.msra.mxu0 0.0
    %1022 = vmatprep.subr.mxu0 0.0
    %1023 = vmatpush1.msra.mxu0 0.0
    %1024 = vmatprep.subr.mxu0 0.0
    %1025 = vmatpush1.msra.mxu0 0.0
    %1026 = vmatprep.subr.mxu0 0.0
    %1027 = vmatpush1.msra.mxu0 0.0
    %1028 = vmatprep.subr.mxu0 0.0
    %1029 = vmatpush1.msra.mxu0 %v993
    %1030 = vmatprep.subr.mxu0 0.0
    %1031 = vmatpush2.msra.mxu0 0.0
    %1032 = vmatprep.subr.mxu0 0.0
    %1033 = vmatpush2.msra.mxu0 0.0
    %1034 = vmatprep.subr.mxu0 0.0
    %1035 = vmatpush2.msra.mxu0 0.0
    %1036 = vmatprep.subr.mxu0 0.0
    %1037 = vmatpush2.msra.mxu0 0.0
    %1038 = vmatprep.subr.mxu0 0.0
    %1039 = vmatpush2.msra.mxu0 0.0
    %1040 = vmatprep.subr.mxu0 0.0
    %1041 = vmatpush2.msra.mxu0 0.0
    %1042 = vmatprep.subr.mxu0 0.0
    %1043 = vmatpush2.msra.mxu0 0.0
    %1044 = vmatprep.subr.mxu0 0.0
    %1045 = vmatpush2.msra.mxu0 0.0
    %1046 = vmatprep.subr.mxu0 0.0
    %1047 = vmatpush2.msra.mxu0 0.0
    %1048 = vmatprep.subr.mxu0 0.0
    %1049 = vmatpush2.msra.mxu0 0.0
    %1050 = vmatprep.subr.mxu0 0.0
    %1051 = vmatpush2.msra.mxu0 0.0
    %1052 = vmatprep.subr.mxu0 0.0
    %1053 = vmatpush2.msra.mxu0 0.0
    %1054 = vmatprep.subr.mxu0 0.0
    %1055 = vmatpush2.msra.mxu0 0.0
    %1056 = vmatprep.subr.mxu0 0.0
    %1057 = vmatpush2.msra.mxu0 0.0
    %1058 = vmatprep.subr.mxu0 0.0
    %1059 = vmatpush2.msra.mxu0 0.0
    %1060 = vmatprep.subr.mxu0 0.0
    %1061 = vmatpush2.msra.mxu0 0.0
    %1062 = vmatprep.mubr.f32.mxu0 0.0
    %1063 = vmatmul.mubr.f32.gmra.mxu0 %v996
    %v1064 = vpop.f32.mrf.mxu0
    %v1065 = vadd.f32 0.0, %v1064
    %v1066 = vpop.f32.mrf.mxu0
    %1067 = vdwg.mxu0
    %1068 = vrot.lane.b32.xlu0 %v184, 112
    %v1069 = vpop.permute.xlu0 %1068
    %v1072 = vsel %vm197, %v910, 0
    %1074 = vmatprep.subr.mxu0 0.0
    %1075 = vmatpush1.msra.mxu0 0.0
    %1076 = vmatprep.subr.mxu0 0.0
    %1077 = vmatpush1.msra.mxu0 0.0
    %1078 = vmatprep.subr.mxu0 0.0
    %1079 = vmatpush1.msra.mxu0 0.0
    %1080 = vmatprep.subr.mxu0 0.0
    %1081 = vmatpush1.msra.mxu0 0.0
    %1082 = vmatprep.subr.mxu0 0.0
    %1083 = vmatpush1.msra.mxu0 0.0
    %1084 = vmatprep.subr.mxu0 0.0
    %1085 = vmatpush1.msra.mxu0 0.0
    %1086 = vmatprep.subr.mxu0 0.0
    %1087 = vmatpush1.msra.mxu0 0.0
    %1088 = vmatprep.subr.mxu0 0.0
    %1089 = vmatpush1.msra.mxu0 0.0
    %1090 = vmatprep.subr.mxu0 0.0
    %1091 = vmatpush1.msra.mxu0 0.0
    %1092 = vmatprep.subr.mxu0 0.0
    %1093 = vmatpush1.msra.mxu0 0.0
    %1094 = vmatprep.subr.mxu0 0.0
    %1095 = vmatpush1.msra.mxu0 0.0
    %1096 = vmatprep.subr.mxu0 0.0
    %1097 = vmatpush1.msra.mxu0 0.0
    %1098 = vmatprep.subr.mxu0 0.0
    %1099 = vmatpush1.msra.mxu0 0.0
    %1100 = vmatprep.subr.mxu0 0.0
    %1101 = vmatpush1.msra.mxu0 0.0
    %1102 = vmatprep.subr.mxu0 0.0
    %1103 = vmatpush1.msra.mxu0 0.0
    %1104 = vmatprep.subr.mxu0 0.0
    %1105 = vmatpush1.msra.mxu0 %v1069
    %1106 = vmatprep.subr.mxu0 0.0
    %1107 = vmatpush2.msra.mxu0 0.0
    %1108 = vmatprep.subr.mxu0 0.0
    %1109 = vmatpush2.msra.mxu0 0.0
    %1110 = vmatprep.subr.mxu0 0.0
    %1111 = vmatpush2.msra.mxu0 0.0
    %1112 = vmatprep.subr.mxu0 0.0
    %1113 = vmatpush2.msra.mxu0 0.0
    %1114 = vmatprep.subr.mxu0 0.0
    %1115 = vmatpush2.msra.mxu0 0.0
    %1116 = vmatprep.subr.mxu0 0.0
    %1117 = vmatpush2.msra.mxu0 0.0
    %1118 = vmatprep.subr.mxu0 0.0
    %1119 = vmatpush2.msra.mxu0 0.0
    %1120 = vmatprep.subr.mxu0 0.0
    %1121 = vmatpush2.msra.mxu0 0.0
    %1122 = vmatprep.subr.mxu0 0.0
    %1123 = vmatpush2.msra.mxu0 0.0
    %1124 = vmatprep.subr.mxu0 0.0
    %1125 = vmatpush2.msra.mxu0 0.0
    %1126 = vmatprep.subr.mxu0 0.0
    %1127 = vmatpush2.msra.mxu0 0.0
    %1128 = vmatprep.subr.mxu0 0.0
    %1129 = vmatpush2.msra.mxu0 0.0
    %1130 = vmatprep.subr.mxu0 0.0
    %1131 = vmatpush2.msra.mxu0 0.0
    %1132 = vmatprep.subr.mxu0 0.0
    %1133 = vmatpush2.msra.mxu0 0.0
    %1134 = vmatprep.subr.mxu0 0.0
    %1135 = vmatpush2.msra.mxu0 0.0
    %1136 = vmatprep.subr.mxu0 0.0
    %1137 = vmatpush2.msra.mxu0 0.0
    %1138 = vmatprep.mubr.f32.mxu0 0.0
    %1139 = vmatmul.mubr.f32.gmra.mxu0 %v1072
    %v1140 = vpop.f32.mrf.mxu0
    %v1141 = vadd.f32 0.0, %v1140
    %v1142 = vpop.f32.mrf.mxu0
    %1143 = vdwg.mxu0
    %1144 = vrot.lane.b32.xlu0 %v186, 112
    %v1145 = vpop.permute.xlu0 %1144
    %v1148 = vsel %vm197, %v911, 0
    %1150 = vmatprep.subr.mxu0 0.0
    %1151 = vmatpush1.msra.mxu0 0.0
    %1152 = vmatprep.subr.mxu0 0.0
    %1153 = vmatpush1.msra.mxu0 0.0
    %1154 = vmatprep.subr.mxu0 0.0
    %1155 = vmatpush1.msra.mxu0 0.0
    %1156 = vmatprep.subr.mxu0 0.0
    %1157 = vmatpush1.msra.mxu0 0.0
    %1158 = vmatprep.subr.mxu0 0.0
    %1159 = vmatpush1.msra.mxu0 0.0
    %1160 = vmatprep.subr.mxu0 0.0
    %1161 = vmatpush1.msra.mxu0 0.0
    %1162 = vmatprep.subr.mxu0 0.0
    %1163 = vmatpush1.msra.mxu0 0.0
    %1164 = vmatprep.subr.mxu0 0.0
    %1165 = vmatpush1.msra.mxu0 0.0
    %1166 = vmatprep.subr.mxu0 0.0
    %1167 = vmatpush1.msra.mxu0 0.0
    %1168 = vmatprep.subr.mxu0 0.0
    %1169 = vmatpush1.msra.mxu0 0.0
    %1170 = vmatprep.subr.mxu0 0.0
    %1171 = vmatpush1.msra.mxu0 0.0
    %1172 = vmatprep.subr.mxu0 0.0
    %1173 = vmatpush1.msra.mxu0 0.0
    %1174 = vmatprep.subr.mxu0 0.0
    %1175 = vmatpush1.msra.mxu0 0.0
    %1176 = vmatprep.subr.mxu0 0.0
    %1177 = vmatpush1.msra.mxu0 0.0
    %1178 = vmatprep.subr.mxu0 0.0
    %1179 = vmatpush1.msra.mxu0 0.0
    %1180 = vmatprep.subr.mxu0 0.0
    %1181 = vmatpush1.msra.mxu0 %v1145
    %1182 = vmatprep.subr.mxu0 0.0
    %1183 = vmatpush2.msra.mxu0 0.0
    %1184 = vmatprep.subr.mxu0 0.0
    %1185 = vmatpush2.msra.mxu0 0.0
    %1186 = vmatprep.subr.mxu0 0.0
    %1187 = vmatpush2.msra.mxu0 0.0
    %1188 = vmatprep.subr.mxu0 0.0
    %1189 = vmatpush2.msra.mxu0 0.0
    %1190 = vmatprep.subr.mxu0 0.0
    %1191 = vmatpush2.msra.mxu0 0.0
    %1192 = vmatprep.subr.mxu0 0.0
    %1193 = vmatpush2.msra.mxu0 0.0
    %1194 = vmatprep.subr.mxu0 0.0
    %1195 = vmatpush2.msra.mxu0 0.0
    %1196 = vmatprep.subr.mxu0 0.0
    %1197 = vmatpush2.msra.mxu0 0.0
    %1198 = vmatprep.subr.mxu0 0.0
    %1199 = vmatpush2.msra.mxu0 0.0
    %1200 = vmatprep.subr.mxu0 0.0
    %1201 = vmatpush2.msra.mxu0 0.0
    %1202 = vmatprep.subr.mxu0 0.0
    %1203 = vmatpush2.msra.mxu0 0.0
    %1204 = vmatprep.subr.mxu0 0.0
    %1205 = vmatpush2.msra.mxu0 0.0
    %1206 = vmatprep.subr.mxu0 0.0
    %1207 = vmatpush2.msra.mxu0 0.0
    %1208 = vmatprep.subr.mxu0 0.0
    %1209 = vmatpush2.msra.mxu0 0.0
    %1210 = vmatprep.subr.mxu0 0.0
    %1211 = vmatpush2.msra.mxu0 0.0
    %1212 = vmatprep.subr.mxu0 0.0
    %1213 = vmatpush2.msra.mxu0 0.0
    %1214 = vmatprep.mubr.f32.mxu0 0.0
    %1215 = vmatmul.mubr.f32.gmra.mxu0 %v1148
    %v1216 = vpop.f32.mrf.mxu0
    %v1217 = vadd.f32 0.0, %v1216
    %v1218 = vpop.f32.mrf.mxu0
    %1219 = vdwg.mxu0
    %1220 = vrot.lane.b32.xlu0 %v188, 112
    %v1221 = vpop.permute.xlu0 %1220
    %v1224 = vsel %vm197, %v912, 0
    %1226 = vmatprep.subr.mxu0 0.0
    %1227 = vmatpush1.msra.mxu0 0.0
    %1228 = vmatprep.subr.mxu0 0.0
    %1229 = vmatpush1.msra.mxu0 0.0
    %1230 = vmatprep.subr.mxu0 0.0
    %1231 = vmatpush1.msra.mxu0 0.0
    %1232 = vmatprep.subr.mxu0 0.0
    %1233 = vmatpush1.msra.mxu0 0.0
    %1234 = vmatprep.subr.mxu0 0.0
    %1235 = vmatpush1.msra.mxu0 0.0
    %1236 = vmatprep.subr.mxu0 0.0
    %1237 = vmatpush1.msra.mxu0 0.0
    %1238 = vmatprep.subr.mxu0 0.0
    %1239 = vmatpush1.msra.mxu0 0.0
    %1240 = vmatprep.subr.mxu0 0.0
    %1241 = vmatpush1.msra.mxu0 0.0
    %1242 = vmatprep.subr.mxu0 0.0
    %1243 = vmatpush1.msra.mxu0 0.0
    %1244 = vmatprep.subr.mxu0 0.0
    %1245 = vmatpush1.msra.mxu0 0.0
    %1246 = vmatprep.subr.mxu0 0.0
    %1247 = vmatpush1.msra.mxu0 0.0
    %1248 = vmatprep.subr.mxu0 0.0
    %1249 = vmatpush1.msra.mxu0 0.0
    %1250 = vmatprep.subr.mxu0 0.0
    %1251 = vmatpush1.msra.mxu0 0.0
    %1252 = vmatprep.subr.mxu0 0.0
    %1253 = vmatpush1.msra.mxu0 0.0
    %1254 = vmatprep.subr.mxu0 0.0
    %1255 = vmatpush1.msra.mxu0 0.0
    %1256 = vmatprep.subr.mxu0 0.0
    %1257 = vmatpush1.msra.mxu0 %v1221
    %1258 = vmatprep.subr.mxu0 0.0
    %1259 = vmatpush2.msra.mxu0 0.0
    %1260 = vmatprep.subr.mxu0 0.0
    %1261 = vmatpush2.msra.mxu0 0.0
    %1262 = vmatprep.subr.mxu0 0.0
    %1263 = vmatpush2.msra.mxu0 0.0
    %1264 = vmatprep.subr.mxu0 0.0
    %1265 = vmatpush2.msra.mxu0 0.0
    %1266 = vmatprep.subr.mxu0 0.0
    %1267 = vmatpush2.msra.mxu0 0.0
    %1268 = vmatprep.subr.mxu0 0.0
    %1269 = vmatpush2.msra.mxu0 0.0
    %1270 = vmatprep.subr.mxu0 0.0
    %1271 = vmatpush2.msra.mxu0 0.0
    %1272 = vmatprep.subr.mxu0 0.0
    %1273 = vmatpush2.msra.mxu0 0.0
    %1274 = vmatprep.subr.mxu0 0.0
    %1275 = vmatpush2.msra.mxu0 0.0
    %1276 = vmatprep.subr.mxu0 0.0
    %1277 = vmatpush2.msra.mxu0 0.0
    %1278 = vmatprep.subr.mxu0 0.0
    %1279 = vmatpush2.msra.mxu0 0.0
    %1280 = vmatprep.subr.mxu0 0.0
    %1281 = vmatpush2.msra.mxu0 0.0
    %1282 = vmatprep.subr.mxu0 0.0
    %1283 = vmatpush2.msra.mxu0 0.0
    %1284 = vmatprep.subr.mxu0 0.0
    %1285 = vmatpush2.msra.mxu0 0.0
    %1286 = vmatprep.subr.mxu0 0.0
    %1287 = vmatpush2.msra.mxu0 0.0
    %1288 = vmatprep.subr.mxu0 0.0
    %1289 = vmatpush2.msra.mxu0 0.0
    %1290 = vmatprep.mubr.f32.mxu0 0.0
    %1291 = vmatmul.mubr.f32.gmra.mxu0 %v1224
    %v1292 = vpop.f32.mrf.mxu0
    %v1293 = vadd.f32 0.0, %v1292
    %v1294 = vpop.f32.mrf.mxu0
    %1295 = vdwg.mxu0
    %1296 = vrot.lane.b32.xlu0 %v190, 112
    %v1297 = vpop.permute.xlu0 %1296
    %v1300 = vsel %vm197, %v913, 0
    %1302 = vmatprep.subr.mxu0 0.0
    %1303 = vmatpush1.msra.mxu0 0.0
    %1304 = vmatprep.subr.mxu0 0.0
    %1305 = vmatpush1.msra.mxu0 0.0
    %1306 = vmatprep.subr.mxu0 0.0
    %1307 = vmatpush1.msra.mxu0 0.0
    %1308 = vmatprep.subr.mxu0 0.0
    %1309 = vmatpush1.msra.mxu0 0.0
    %1310 = vmatprep.subr.mxu0 0.0
    %1311 = vmatpush1.msra.mxu0 0.0
    %1312 = vmatprep.subr.mxu0 0.0
    %1313 = vmatpush1.msra.mxu0 0.0
    %1314 = vmatprep.subr.mxu0 0.0
    %1315 = vmatpush1.msra.mxu0 0.0
    %1316 = vmatprep.subr.mxu0 0.0
    %1317 = vmatpush1.msra.mxu0 0.0
    %1318 = vmatprep.subr.mxu0 0.0
    %1319 = vmatpush1.msra.mxu0 0.0
    %1320 = vmatprep.subr.mxu0 0.0
    %1321 = vmatpush1.msra.mxu0 0.0
    %1322 = vmatprep.subr.mxu0 0.0
    %1323 = vmatpush1.msra.mxu0 0.0
    %1324 = vmatprep.subr.mxu0 0.0
    %1325 = vmatpush1.msra.mxu0 0.0
    %1326 = vmatprep.subr.mxu0 0.0
    %1327 = vmatpush1.msra.mxu0 0.0
    %1328 = vmatprep.subr.mxu0 0.0
    %1329 = vmatpush1.msra.mxu0 0.0
    %1330 = vmatprep.subr.mxu0 0.0
    %1331 = vmatpush1.msra.mxu0 0.0
    %1332 = vmatprep.subr.mxu0 0.0
    %1333 = vmatpush1.msra.mxu0 %v1297
    %1334 = vmatprep.subr.mxu0 0.0
    %1335 = vmatpush2.msra.mxu0 0.0
    %1336 = vmatprep.subr.mxu0 0.0
    %1337 = vmatpush2.msra.mxu0 0.0
    %1338 = vmatprep.subr.mxu0 0.0
    %1339 = vmatpush2.msra.mxu0 0.0
    %1340 = vmatprep.subr.mxu0 0.0
    %1341 = vmatpush2.msra.mxu0 0.0
    %1342 = vmatprep.subr.mxu0 0.0
    %1343 = vmatpush2.msra.mxu0 0.0
    %1344 = vmatprep.subr.mxu0 0.0
    %1345 = vmatpush2.msra.mxu0 0.0
    %1346 = vmatprep.subr.mxu0 0.0
    %1347 = vmatpush2.msra.mxu0 0.0
    %1348 = vmatprep.subr.mxu0 0.0
    %1349 = vmatpush2.msra.mxu0 0.0
    %1350 = vmatprep.subr.mxu0 0.0
    %1351 = vmatpush2.msra.mxu0 0.0
    %1352 = vmatprep.subr.mxu0 0.0
    %1353 = vmatpush2.msra.mxu0 0.0
    %1354 = vmatprep.subr.mxu0 0.0
    %1355 = vmatpush2.msra.mxu0 0.0
    %1356 = vmatprep.subr.mxu0 0.0
    %1357 = vmatpush2.msra.mxu0 0.0
    %1358 = vmatprep.subr.mxu0 0.0
    %1359 = vmatpush2.msra.mxu0 0.0
    %1360 = vmatprep.subr.mxu0 0.0
    %1361 = vmatpush2.msra.mxu0 0.0
    %1362 = vmatprep.subr.mxu0 0.0
    %1363 = vmatpush2.msra.mxu0 0.0
    %1364 = vmatprep.subr.mxu0 0.0
    %1365 = vmatpush2.msra.mxu0 0.0
    %1366 = vmatprep.mubr.f32.mxu0 0.0
    %1367 = vmatmul.mubr.f32.gmra.mxu0 %v1300
    %v1368 = vpop.f32.mrf.mxu0
    %v1369 = vadd.f32 0.0, %v1368
    %v1370 = vpop.f32.mrf.mxu0
    %1371 = vdwg.mxu0
    %1372 = vrot.lane.b32.xlu0 %v192, 112
    %v1373 = vpop.permute.xlu0 %1372
    %v1376 = vsel %vm197, %v914, 0
    %1378 = vmatprep.subr.mxu0 0.0
    %1379 = vmatpush1.msra.mxu0 0.0
    %1380 = vmatprep.subr.mxu0 0.0
    %1381 = vmatpush1.msra.mxu0 0.0
    %1382 = vmatprep.subr.mxu0 0.0
    %1383 = vmatpush1.msra.mxu0 0.0
    %1384 = vmatprep.subr.mxu0 0.0
    %1385 = vmatpush1.msra.mxu0 0.0
    %1386 = vmatprep.subr.mxu0 0.0
    %1387 = vmatpush1.msra.mxu0 0.0
    %1388 = vmatprep.subr.mxu0 0.0
    %1389 = vmatpush1.msra.mxu0 0.0
    %1390 = vmatprep.subr.mxu0 0.0
    %1391 = vmatpush1.msra.mxu0 0.0
    %1392 = vmatprep.subr.mxu0 0.0
    %1393 = vmatpush1.msra.mxu0 0.0
    %1394 = vmatprep.subr.mxu0 0.0
    %1395 = vmatpush1.msra.mxu0 0.0
    %1396 = vmatprep.subr.mxu0 0.0
    %1397 = vmatpush1.msra.mxu0 0.0
    %1398 = vmatprep.subr.mxu0 0.0
    %1399 = vmatpush1.msra.mxu0 0.0
    %1400 = vmatprep.subr.mxu0 0.0
    %1401 = vmatpush1.msra.mxu0 0.0
    %1402 = vmatprep.subr.mxu0 0.0
    %1403 = vmatpush1.msra.mxu0 0.0
    %1404 = vmatprep.subr.mxu0 0.0
    %1405 = vmatpush1.msra.mxu0 0.0
    %1406 = vmatprep.subr.mxu0 0.0
    %1407 = vmatpush1.msra.mxu0 0.0
    %1408 = vmatprep.subr.mxu0 0.0
    %1409 = vmatpush1.msra.mxu0 %v1373
    %1410 = vmatprep.subr.mxu0 0.0
    %1411 = vmatpush2.msra.mxu0 0.0
    %1412 = vmatprep.subr.mxu0 0.0
    %1413 = vmatpush2.msra.mxu0 0.0
    %1414 = vmatprep.subr.mxu0 0.0
    %1415 = vmatpush2.msra.mxu0 0.0
    %1416 = vmatprep.subr.mxu0 0.0
    %1417 = vmatpush2.msra.mxu0 0.0
    %1418 = vmatprep.subr.mxu0 0.0
    %1419 = vmatpush2.msra.mxu0 0.0
    %1420 = vmatprep.subr.mxu0 0.0
    %1421 = vmatpush2.msra.mxu0 0.0
    %1422 = vmatprep.subr.mxu0 0.0
    %1423 = vmatpush2.msra.mxu0 0.0
    %1424 = vmatprep.subr.mxu0 0.0
    %1425 = vmatpush2.msra.mxu0 0.0
    %1426 = vmatprep.subr.mxu0 0.0
    %1427 = vmatpush2.msra.mxu0 0.0
    %1428 = vmatprep.subr.mxu0 0.0
    %1429 = vmatpush2.msra.mxu0 0.0
    %1430 = vmatprep.subr.mxu0 0.0
    %1431 = vmatpush2.msra.mxu0 0.0
    %1432 = vmatprep.subr.mxu0 0.0
    %1433 = vmatpush2.msra.mxu0 0.0
    %1434 = vmatprep.subr.mxu0 0.0
    %1435 = vmatpush2.msra.mxu0 0.0
    %1436 = vmatprep.subr.mxu0 0.0
    %1437 = vmatpush2.msra.mxu0 0.0
    %1438 = vmatprep.subr.mxu0 0.0
    %1439 = vmatpush2.msra.mxu0 0.0
    %1440 = vmatprep.subr.mxu0 0.0
    %1441 = vmatpush2.msra.mxu0 0.0
    %1442 = vmatprep.mubr.f32.mxu0 0.0
    %1443 = vmatmul.mubr.f32.gmra.mxu0 %v1376
    %v1444 = vpop.f32.mrf.mxu0
    %v1445 = vadd.f32 0.0, %v1444
    %v1446 = vpop.f32.mrf.mxu0
    %1447 = vdwg.mxu0
    %1448 = vrot.lane.b32.xlu0 %v194, 112
    %v1449 = vpop.permute.xlu0 %1448
    %v1452 = vsel %vm197, %v915, 0
    %1454 = vmatprep.subr.mxu0 0.0
    %1455 = vmatpush1.msra.mxu0 0.0
    %1456 = vmatprep.subr.mxu0 0.0
    %1457 = vmatpush1.msra.mxu0 0.0
    %1458 = vmatprep.subr.mxu0 0.0
    %1459 = vmatpush1.msra.mxu0 0.0
    %1460 = vmatprep.subr.mxu0 0.0
    %1461 = vmatpush1.msra.mxu0 0.0
    %1462 = vmatprep.subr.mxu0 0.0
    %1463 = vmatpush1.msra.mxu0 0.0
    %1464 = vmatprep.subr.mxu0 0.0
    %1465 = vmatpush1.msra.mxu0 0.0
    %1466 = vmatprep.subr.mxu0 0.0
    %1467 = vmatpush1.msra.mxu0 0.0
    %1468 = vmatprep.subr.mxu0 0.0
    %1469 = vmatpush1.msra.mxu0 0.0
    %1470 = vmatprep.subr.mxu0 0.0
    %1471 = vmatpush1.msra.mxu0 0.0
    %1472 = vmatprep.subr.mxu0 0.0
    %1473 = vmatpush1.msra.mxu0 0.0
    %1474 = vmatprep.subr.mxu0 0.0
    %1475 = vmatpush1.msra.mxu0 0.0
    %1476 = vmatprep.subr.mxu0 0.0
    %1477 = vmatpush1.msra.mxu0 0.0
    %1478 = vmatprep.subr.mxu0 0.0
    %1479 = vmatpush1.msra.mxu0 0.0
    %1480 = vmatprep.subr.mxu0 0.0
    %1481 = vmatpush1.msra.mxu0 0.0
    %1482 = vmatprep.subr.mxu0 0.0
    %1483 = vmatpush1.msra.mxu0 0.0
    %1484 = vmatprep.subr.mxu0 0.0
    %1485 = vmatpush1.msra.mxu0 %v1449
    %1486 = vmatprep.subr.mxu0 0.0
    %1487 = vmatpush2.msra.mxu0 0.0
    %1488 = vmatprep.subr.mxu0 0.0
    %1489 = vmatpush2.msra.mxu0 0.0
    %1490 = vmatprep.subr.mxu0 0.0
    %1491 = vmatpush2.msra.mxu0 0.0
    %1492 = vmatprep.subr.mxu0 0.0
    %1493 = vmatpush2.msra.mxu0 0.0
    %1494 = vmatprep.subr.mxu0 0.0
    %1495 = vmatpush2.msra.mxu0 0.0
    %1496 = vmatprep.subr.mxu0 0.0
    %1497 = vmatpush2.msra.mxu0 0.0
    %1498 = vmatprep.subr.mxu0 0.0
    %1499 = vmatpush2.msra.mxu0 0.0
    %1500 = vmatprep.subr.mxu0 0.0
    %1501 = vmatpush2.msra.mxu0 0.0
    %1502 = vmatprep.subr.mxu0 0.0
    %1503 = vmatpush2.msra.mxu0 0.0
    %1504 = vmatprep.subr.mxu0 0.0
    %1505 = vmatpush2.msra.mxu0 0.0
    %1506 = vmatprep.subr.mxu0 0.0
    %1507 = vmatpush2.msra.mxu0 0.0
    %1508 = vmatprep.subr.mxu0 0.0
    %1509 = vmatpush2.msra.mxu0 0.0
    %1510 = vmatprep.subr.mxu0 0.0
    %1511 = vmatpush2.msra.mxu0 0.0
    %1512 = vmatprep.subr.mxu0 0.0
    %1513 = vmatpush2.msra.mxu0 0.0
    %1514 = vmatprep.subr.mxu0 0.0
    %1515 = vmatpush2.msra.mxu0 0.0
    %1516 = vmatprep.subr.mxu0 0.0
    %1517 = vmatpush2.msra.mxu0 0.0
    %1518 = vmatprep.mubr.f32.mxu0 0.0
    %1519 = vmatmul.mubr.f32.gmra.mxu0 %v1452
    %v1520 = vpop.f32.mrf.mxu0
    %v1521 = vadd.f32 0.0, %v1520
    %v1522 = vpop.f32.mrf.mxu0
    %1523 = vdwg.mxu0
    %1526 = vrot.lane.b32.xlu0 %v1141, 8
    %v1527 = vpop.permute.xlu0 %1526
    %1528 = vrot.lane.b32.xlu0 %v1217, 8
    %v1529 = vpop.permute.xlu0 %1528
    %1534 = vrot.lane.b32.xlu0 %v1293, 16
    %v1535 = vpop.permute.xlu0 %1534
    %1536 = vrot.lane.b32.xlu0 %v1369, 16
    %v1537 = vpop.permute.xlu0 %1536
    %1542 = vrot.lane.b32.xlu0 %v1445, 24
    %v1543 = vpop.permute.xlu0 %1542
    %1544 = vrot.lane.b32.xlu0 %v1521, 24
    %v1545 = vpop.permute.xlu0 %1544
    %v1548 = vsel %vm197, %v989, %v1527
    %v1549 = vsel %vm197, %v1065, %v1529
    %vm1550 = vcmask 130048
    %v1551 = vsel %vm1550, %v1548, %v1535
    %v1552 = vsel %vm1550, %v1549, %v1537
    %vm1553 = vcmask 195584
    %v1554 = vsel %vm1553, %v1551, %v1543
    %v1555 = vsel %vm1553, %v1552, %v1545
    %v1556 = vlaneseq
    %v1557 = vshrl.u32 %v1556, 7
    %v1558 = vsub.s32 0, %v1557
    %v1559 = vrot.slane %v23, %v1558
    %v1561 = vsel %vm56, %v1554, 0
    %v1564 = vsel %vm56, %v1555, 0
    %1566 = vmatprep.subr.mxu0 0.0
    %1567 = vmatpush1.msra.mxu0 0.0
    %1568 = vmatprep.subr.mxu0 0.0
    %1569 = vmatpush1.msra.mxu0 0.0
    %1570 = vmatprep.subr.mxu0 0.0
    %1571 = vmatpush1.msra.mxu0 0.0
    %1572 = vmatprep.subr.mxu0 0.0
    %1573 = vmatpush1.msra.mxu0 0.0
    %1574 = vmatprep.subr.mxu0 0.0
    %1575 = vmatpush1.msra.mxu0 0.0
    %1576 = vmatprep.subr.mxu0 0.0
    %1577 = vmatpush1.msra.mxu0 0.0
    %1578 = vmatprep.subr.mxu0 0.0
    %1579 = vmatpush1.msra.mxu0 0.0
    %1580 = vmatprep.subr.mxu0 0.0
    %1581 = vmatpush1.msra.mxu0 0.0
    %1582 = vmatprep.subr.mxu0 0.0
    %1583 = vmatpush1.msra.mxu0 0.0
    %1584 = vmatprep.subr.mxu0 0.0
    %1585 = vmatpush1.msra.mxu0 0.0
    %1586 = vmatprep.subr.mxu0 0.0
    %1587 = vmatpush1.msra.mxu0 0.0
    %1588 = vmatprep.subr.mxu0 0.0
    %1589 = vmatpush1.msra.mxu0 0.0
    %1590 = vmatprep.subr.mxu0 0.0
    %1591 = vmatpush1.msra.mxu0 %v33
    %1592 = vmatprep.subr.mxu0 0.0
    %1593 = vmatpush1.msra.mxu0 %v32
    %1594 = vmatprep.subr.mxu0 0.0
    %1595 = vmatpush1.msra.mxu0 %v31
    %1596 = vmatprep.subr.mxu0 0.0
    %1597 = vmatpush1.msra.mxu0 %v30
    %1598 = vmatprep.subr.mxu0 0.0
    %1599 = vmatpush2.msra.mxu0 0.0
    %1600 = vmatprep.subr.mxu0 0.0
    %1601 = vmatpush2.msra.mxu0 0.0
    %1602 = vmatprep.subr.mxu0 0.0
    %1603 = vmatpush2.msra.mxu0 0.0
    %1604 = vmatprep.subr.mxu0 0.0
    %1605 = vmatpush2.msra.mxu0 0.0
    %1606 = vmatprep.subr.mxu0 0.0
    %1607 = vmatpush2.msra.mxu0 0.0
    %1608 = vmatprep.subr.mxu0 0.0
    %1609 = vmatpush2.msra.mxu0 0.0
    %1610 = vmatprep.subr.mxu0 0.0
    %1611 = vmatpush2.msra.mxu0 0.0
    %1612 = vmatprep.subr.mxu0 0.0
    %1613 = vmatpush2.msra.mxu0 0.0
    %1614 = vmatprep.subr.mxu0 0.0
    %1615 = vmatpush2.msra.mxu0 0.0
    %1616 = vmatprep.subr.mxu0 0.0
    %1617 = vmatpush2.msra.mxu0 0.0
    %1618 = vmatprep.subr.mxu0 0.0
    %1619 = vmatpush2.msra.mxu0 0.0
    %1620 = vmatprep.subr.mxu0 0.0
    %1621 = vmatpush2.msra.mxu0 0.0
    %1622 = vmatprep.subr.mxu0 0.0
    %1623 = vmatpush2.msra.mxu0 0.0
    %1624 = vmatprep.subr.mxu0 0.0
    %1625 = vmatpush2.msra.mxu0 0.0
    %1626 = vmatprep.subr.mxu0 0.0
    %1627 = vmatpush2.msra.mxu0 0.0
    %1628 = vmatprep.subr.mxu0 0.0
    %1629 = vmatpush2.msra.mxu0 0.0
    %1630 = vmatprep.mubr.f32.mxu0 0.0
    %1631 = vmatmul.mubr.f32.gmra.mxu0 %v1561
    %v1632 = vpop.f32.mrf.mxu0
    %v1633 = vadd.f32 %v1559, %v1632
    %v1634 = vpop.f32.mrf.mxu0
    %1635 = vmatprep.mubr.f32.mxu0 0.0
    %1636 = vmatmul.mubr.f32.gmra.mxu0 %v1564
    %v1637 = vpop.f32.mrf.mxu0
    %v1638 = vadd.f32 %v1559, %v1637
    %v1639 = vpop.f32.mrf.mxu0
    %1640 = vdwg.mxu0
    %v1641 = vadd.f32 %v1633, %v54
    %v1642 = vadd.f32 %v1638, %v55
    %v1643 = vsel %vm56, %v1641, 0.0
    %1644 = vadd.xlane.f32.xlu0 %v1643
    %v1645 = vpop.xlane.xlu0 %1644
    %v1646 = vsel %vm56, %v1642, 0.0
    %1647 = vadd.xlane.f32.xlu0 %v1646
    %v1648 = vpop.xlane.xlu0 %1647
    %v1649 = vmul.f32 %v1645, %v63
    %v1650 = vmul.f32 %v1648, %v63
    %v1651 = vsub.f32 %v1641, %v1649
    %v1652 = vsub.f32 %v1642, %v1650
    %v1653 = vmul.f32 %v1651, %v1651
    %v1654 = vmul.f32 %v1652, %v1652
    %v1655 = vsel %vm56, %v1653, 0.0
    %1656 = vadd.xlane.f32.xlu0 %v1655
    %v1657 = vpop.xlane.xlu0 %1656
    %v1658 = vsel %vm56, %v1654, 0.0
    %1659 = vadd.xlane.f32.xlu0 %v1658
    %v1660 = vpop.xlane.xlu0 %1659
    %v1661 = vmul.f32 %v1657, %v63
    %v1662 = vmul.f32 %v1660, %v63
    %v1663 = vadd.f32 %v1661, 1e-05
    %v1664 = vadd.f32 %v1662, 1e-05
    %v1665 = vrsqrt.pop %v1663
    %v1666 = vrsqrt.pop %v1664
    %v1667 = vmul.f32 %v1651, %v1665
    %v1668 = vmul.f32 %v1652, %v1666
    %v1669 = vlaneseq
    %v1670 = vshrl.u32 %v1669, 7
    %v1671 = vsub.s32 0, %v1670
    %v1672 = vrot.slane %v20, %v1671
    %v1673 = vmul.f32 %v1667, %v1672
    %v1674 = vmul.f32 %v1668, %v1672
    %v1675 = vlaneseq
    %v1676 = vshrl.u32 %v1675, 7
    %v1677 = vsub.s32 0, %v1676
    %v1678 = vrot.slane %v21, %v1677
    %v1679 = vadd.f32 %v1673, %v1678
    %v1680 = vadd.f32 %v1674, %v1678
    %v1681 = vlaneseq
    %v1682 = vshrl.u32 %v1681, 7
    %v1683 = vsub.s32 0, %v1682
    %v1684 = vrot.slane %v24, %v1683
    %v1686 = vsel %vm56, %v1679, 0
    %v1689 = vsel %vm56, %v1680, 0
    %1691 = vmatprep.subr.mxu0 0.0
    %1692 = vmatpush1.msra.mxu0 0.0
    %1693 = vmatprep.subr.mxu0 0.0
    %1694 = vmatpush1.msra.mxu0 0.0
    %1695 = vmatprep.subr.mxu0 0.0
    %1696 = vmatpush1.msra.mxu0 0.0
    %1697 = vmatprep.subr.mxu0 0.0
    %1698 = vmatpush1.msra.mxu0 0.0
    %1699 = vmatprep.subr.mxu0 0.0
    %1700 = vmatpush1.msra.mxu0 0.0
    %1701 = vmatprep.subr.mxu0 0.0
    %1702 = vmatpush1.msra.mxu0 0.0
    %1703 = vmatprep.subr.mxu0 0.0
    %1704 = vmatpush1.msra.mxu0 0.0
    %1705 = vmatprep.subr.mxu0 0.0
    %1706 = vmatpush1.msra.mxu0 0.0
    %1707 = vmatprep.subr.mxu0 0.0
    %1708 = vmatpush1.msra.mxu0 0.0
    %1709 = vmatprep.subr.mxu0 0.0
    %1710 = vmatpush1.msra.mxu0 0.0
    %1711 = vmatprep.subr.mxu0 0.0
    %1712 = vmatpush1.msra.mxu0 0.0
    %1713 = vmatprep.subr.mxu0 0.0
    %1714 = vmatpush1.msra.mxu0 0.0
    %1715 = vmatprep.subr.mxu0 0.0
    %1716 = vmatpush1.msra.mxu0 %v37
    %1717 = vmatprep.subr.mxu0 0.0
    %1718 = vmatpush1.msra.mxu0 %v36
    %1719 = vmatprep.subr.mxu0 0.0
    %1720 = vmatpush1.msra.mxu0 %v35
    %1721 = vmatprep.subr.mxu0 0.0
    %1722 = vmatpush1.msra.mxu0 %v34
    %1723 = vmatprep.subr.mxu0 0.0
    %1724 = vmatpush2.msra.mxu0 0.0
    %1725 = vmatprep.subr.mxu0 0.0
    %1726 = vmatpush2.msra.mxu0 0.0
    %1727 = vmatprep.subr.mxu0 0.0
    %1728 = vmatpush2.msra.mxu0 0.0
    %1729 = vmatprep.subr.mxu0 0.0
    %1730 = vmatpush2.msra.mxu0 0.0
    %1731 = vmatprep.subr.mxu0 0.0
    %1732 = vmatpush2.msra.mxu0 0.0
    %1733 = vmatprep.subr.mxu0 0.0
    %1734 = vmatpush2.msra.mxu0 0.0
    %1735 = vmatprep.subr.mxu0 0.0
    %1736 = vmatpush2.msra.mxu0 0.0
    %1737 = vmatprep.subr.mxu0 0.0
    %1738 = vmatpush2.msra.mxu0 0.0
    %1739 = vmatprep.subr.mxu0 0.0
    %1740 = vmatpush2.msra.mxu0 0.0
    %1741 = vmatprep.subr.mxu0 0.0
    %1742 = vmatpush2.msra.mxu0 0.0
    %1743 = vmatprep.subr.mxu0 0.0
    %1744 = vmatpush2.msra.mxu0 0.0
    %1745 = vmatprep.subr.mxu0 0.0
    %1746 = vmatpush2.msra.mxu0 0.0
    %1747 = vmatprep.subr.mxu0 0.0
    %1748 = vmatpush2.msra.mxu0 0.0
    %1749 = vmatprep.subr.mxu0 0.0
    %1750 = vmatpush2.msra.mxu0 0.0
    %1751 = vmatprep.subr.mxu0 0.0
    %1752 = vmatpush2.msra.mxu0 0.0
    %1753 = vmatprep.subr.mxu0 0.0
    %1754 = vmatpush2.msra.mxu0 0.0
    %1755 = vmatprep.mubr.f32.mxu0 0.0
    %1756 = vmatmul.mubr.f32.gmra.mxu0 %v1686
    %v1757 = vpop.f32.mrf.mxu0
    %v1758 = vadd.f32 %v1684, %v1757
    %v1759 = vpop.f32.mrf.mxu0
    %1760 = vmatprep.mubr.f32.mxu0 0.0
    %1761 = vmatmul.mubr.f32.gmra.mxu0 %v1689
    %v1762 = vpop.f32.mrf.mxu0
    %v1763 = vadd.f32 %v1684, %v1762
    %v1764 = vpop.f32.mrf.mxu0
    %1765 = vdwg.mxu0
    %v1766 = vmul.f32 %v1758, 0.70710677
    %v1767 = vmul.f32 %v1763, 0.70710677
    %v1768 = vand.u32 2147483647, %v1766
    %v1769 = vand.u32 2147483647, %v1767
    %v1770 = vmul.f32 %v1768, 0.3275911
    %v1771 = vmul.f32 %v1769, 0.3275911
    %v1772 = vadd.f32 %v1770, 1.0
    %v1773 = vadd.f32 %v1771, 1.0
    %v1774 = vrcp.pop %v1772
    %v1775 = vmul.f32 1.0, %v1774
    %v1776 = vrcp.pop %v1773
    %v1777 = vmul.f32 1.0, %v1776
    %v1778 = vmul.f32 %v1775, 1.0614054
    %v1779 = vmul.f32 %v1777, 1.0614054
    %v1780 = vadd.f32 %v1778, -1.4531521
    %v1781 = vadd.f32 %v1779, -1.4531521
    %v1782 = vmul.f32 %v1775, %v1780
    %v1783 = vmul.f32 %v1777, %v1781
    %v1784 = vadd.f32 %v1782, 1.4214138
    %v1785 = vadd.f32 %v1783, 1.4214138
    %v1786 = vmul.f32 %v1775, %v1784
    %v1787 = vmul.f32 %v1777, %v1785
    %v1788 = vadd.f32 %v1786, -0.28449672
    %v1789 = vadd.f32 %v1787, -0.28449672
    %v1790 = vmul.f32 %v1775, %v1788
    %v1791 = vmul.f32 %v1777, %v1789
    %v1792 = vadd.f32 %v1790, 0.2548296
    %v1793 = vadd.f32 %v1791, 0.2548296
    %v1794 = vmul.f32 %v1775, %v1792
    %v1795 = vmul.f32 %v1777, %v1793
    %v1796 = vmul.f32 %v1794, 0.5
    %v1797 = vmul.f32 %v1795, 0.5
    %v1798 = vsub.f32 0.0, %v1766
    %v1799 = vsub.f32 0.0, %v1767
    %v1800 = vmul.f32 %v1798, %v1766
    %v1801 = vmul.f32 %v1799, %v1767
    %v1802 = vmul.f32 %v1800, 1.442695
    %v1803 = vpow.pop %v1802
    %v1804 = vmul.f32 %v1801, 1.442695
    %v1805 = vpow.pop %v1804
    %v1806 = vmul.f32 %v1796, %v1803
    %v1807 = vmul.f32 %v1797, %v1805
    %vm1808 = vcmp.ge.f32.partialorder %v1766, 0.0
    %vm1809 = vcmp.ge.f32.partialorder %v1767, 0.0
    %v1810 = vsub.f32 1.0, %v1806
    %v1811 = vsub.f32 1.0, %v1807
    %v1812 = vsel %vm1808, %v1810, %v1806
    %v1813 = vsel %vm1809, %v1811, %v1807
    %v1814 = vmul.f32 %v1758, %v1812
    %v1815 = vmul.f32 %v1763, %v1813
    %v1816 = vlaneseq
    %v1817 = vshrl.u32 %v1816, 7
    %v1818 = vsub.s32 0, %v1817
    %v1819 = vrot.slane %v25, %v1818
    %1820 = vmatprep.subr.mxu0 0.0
    %1821 = vmatpush1.msra.mxu0 %v53
    %1822 = vmatprep.subr.mxu0 0.0
    %1823 = vmatpush1.msra.mxu0 %v52
    %1824 = vmatprep.subr.mxu0 0.0
    %1825 = vmatpush1.msra.mxu0 %v51
    %1826 = vmatprep.subr.mxu0 0.0
    %1827 = vmatpush1.msra.mxu0 %v50
    %1828 = vmatprep.subr.mxu0 0.0
    %1829 = vmatpush1.msra.mxu0 %v49
    %1830 = vmatprep.subr.mxu0 0.0
    %1831 = vmatpush1.msra.mxu0 %v48
    %1832 = vmatprep.subr.mxu0 0.0
    %1833 = vmatpush1.msra.mxu0 %v47
    %1834 = vmatprep.subr.mxu0 0.0
    %1835 = vmatpush1.msra.mxu0 %v46
    %1836 = vmatprep.subr.mxu0 0.0
    %1837 = vmatpush1.msra.mxu0 %v45
    %1838 = vmatprep.subr.mxu0 0.0
    %1839 = vmatpush1.msra.mxu0 %v44
    %1840 = vmatprep.subr.mxu0 0.0
    %1841 = vmatpush1.msra.mxu0 %v43
    %1842 = vmatprep.subr.mxu0 0.0
    %1843 = vmatpush1.msra.mxu0 %v42
    %1844 = vmatprep.subr.mxu0 0.0
    %1845 = vmatpush1.msra.mxu0 %v41
    %1846 = vmatprep.subr.mxu0 0.0
    %1847 = vmatpush1.msra.mxu0 %v40
    %1848 = vmatprep.subr.mxu0 0.0
    %1849 = vmatpush1.msra.mxu0 %v39
    %1850 = vmatprep.subr.mxu0 0.0
    %1851 = vmatpush1.msra.mxu0 %v38
    %1852 = vmatprep.subr.mxu0 0.0
    %1853 = vmatpush2.msra.mxu0 0.0
    %1854 = vmatprep.subr.mxu0 0.0
    %1855 = vmatpush2.msra.mxu0 0.0
    %1856 = vmatprep.subr.mxu0 0.0
    %1857 = vmatpush2.msra.mxu0 0.0
    %1858 = vmatprep.subr.mxu0 0.0
    %1859 = vmatpush2.msra.mxu0 0.0
    %1860 = vmatprep.subr.mxu0 0.0
    %1861 = vmatpush2.msra.mxu0 0.0
    %1862 = vmatprep.subr.mxu0 0.0
    %1863 = vmatpush2.msra.mxu0 0.0
    %1864 = vmatprep.subr.mxu0 0.0
    %1865 = vmatpush2.msra.mxu0 0.0
    %1866 = vmatprep.subr.mxu0 0.0
    %1867 = vmatpush2.msra.mxu0 0.0
    %1868 = vmatprep.subr.mxu0 0.0
    %1869 = vmatpush2.msra.mxu0 0.0
    %1870 = vmatprep.subr.mxu0 0.0
    %1871 = vmatpush2.msra.mxu0 0.0
    %1872 = vmatprep.subr.mxu0 0.0
    %1873 = vmatpush2.msra.mxu0 0.0
    %1874 = vmatprep.subr.mxu0 0.0
    %1875 = vmatpush2.msra.mxu0 0.0
    %1876 = vmatprep.subr.mxu0 0.0
    %1877 = vmatpush2.msra.mxu0 0.0
    %1878 = vmatprep.subr.mxu0 0.0
    %1879 = vmatpush2.msra.mxu0 0.0
    %1880 = vmatprep.subr.mxu0 0.0
    %1881 = vmatpush2.msra.mxu0 0.0
    %1882 = vmatprep.subr.mxu0 0.0
    %1883 = vmatpush2.msra.mxu0 0.0
    %1884 = vmatprep.mubr.f32.mxu0 0.0
    %1885 = vmatmul.mubr.f32.gmra.mxu0 %v1814
    %v1886 = vpop.f32.mrf.mxu0
    %v1887 = vadd.f32 %v1819, %v1886
    %v1888 = vpop.f32.mrf.mxu0
    %1889 = vmatprep.mubr.f32.mxu0 0.0
    %1890 = vmatmul.mubr.f32.gmra.mxu0 %v1815
    %v1891 = vpop.f32.mrf.mxu0
    %v1892 = vadd.f32 %v1819, %v1891
    %v1893 = vpop.f32.mrf.mxu0
    %1894 = vdwg.mxu0
    %v1895 = vadd.f32 %v1887, %v1641
    %v1896 = vadd.f32 %v1892, %v1642
    %1897 = vst.msk [vmem:[#allocation2] sm:$0xff] %vm56, %v1895
    %1898 = vst.msk [vmem:[#allocation2 + $0x8] sm:$0xff] %vm56, %v1896
    // Predicated region
    $region18: #{tpu_custom_call.1} parent=1 // pred_check
      _
    $region19: #{tpu_custom_call.1} parent=1 // pred_check_branch
      %1900 = sbr.rel (0) target = $region21
    $region20: #{tpu_custom_call.1} parent=1 // pred_region
      %s1902 = ssub.s32 256, 256
      %1903 = vsyncadd [#allocation3], %s1902
      %s1904 = sshll.u32 [#allocation2], 4
      %s1905 = int_to_ptr.vmem [resolvable:$true] %s1904
      %1910 = dma.vmem_to_hbm [thread:$0]  %s1905, 256, %s4, [#allocation3], 128, 128, 8
    $region21: #{tpu_custom_call.1} parent=1 // pred_fallthru
      _
    // Predicated region
    $region22: #{tpu_custom_call.1} parent=1 // pred_check
      _
    $region23: #{tpu_custom_call.1} parent=1 // pred_check_branch
      %1912 = sbr.rel (0) target = $region25
    $region24: #{tpu_custom_call.1} parent=1 // pred_region
      %1913 = dma.done [#allocation3], 256
    $region25: #{tpu_custom_call.1} parent=1 // pred_fallthru
      _
    %1914 = vsyncpa [#allocation3], 1

</llo_original>
